<compile_context>
chip_gen: v7x
topology: tpu7x:2x2x1
jax: 0.10.0
libtpu: 0.0.40
codegen_flags: <defaults>
</compile_context>

<pallas_src>
import functools

import jax
import jax.numpy as jnp
from jax import lax
from jax.experimental import pallas as pl
from jax.experimental.pallas import tpu as pltpu

LEAK = 0.2
BN_EPS = 1e-5
_VMEM_LIMIT = 32 * 1024 * 1024
_TILE_CAP = 8192   # lane-dense pixel tile cap (multiple of 512); VMEM-safe on v5e/v6e/v7x


def _leaky_relu(x):
    # max-form: mul + max (2 VALU ops) instead of cmp + select + mul.
    return jnp.maximum(x, LEAK * x)


def _pick_tile(hw):
    # Lane-dense tile over the pixel axis: multiple of 128, capped so the per-step VMEM
    # footprint (h1/h2 intermediates + small double-buffered x/out blocks) stays ~10-16 MiB.
    hw_pad = ((hw + 127) // 128) * 128
    return min(_TILE_CAP, hw_pad)


@functools.lru_cache(maxsize=1)
def _bf16_tail_supported():
    # bf16 VALU exists on v6e / v7x; v5e and older chips have no bf16 VPU -> keep the f32 tail.
    try:
        kind = jax.devices()[0].device_kind.lower()
    except Exception:
        return False
    return not any(tag in kind for tag in ("v2", "v3", "v4", "v5"))


# ---------------------------------------------------------------------------
# Pass 1: per-image, per-channel sum / sum-of-squares of h2 (global BN stats).
# Output blocks are distinct per image (N axis "parallel"), accumulated over the
# tile axis ("arbitrary"); init via pl.when(t == 0).
# ---------------------------------------------------------------------------
def _stats_kernel(x_ref, w1_ref, b1_ref, w2_ref, sum_ref, sumsq_ref, *, hw, tile):
    t = pl.program_id(1)

    @pl.when(t == 0)
    def _():
        sum_ref[...] = jnp.zeros_like(sum_ref)
        sumsq_ref[...] = jnp.zeros_like(sumsq_ref)

    x = x_ref[...]                                                        # bf16 (C_in, T)
    h1 = jnp.dot(w1_ref[...], x, preferred_element_type=jnp.float32)      # (ndf,  T)
    h1 = _leaky_relu(h1 + b1_ref[...])
    h2 = jnp.dot(w2_ref[...], h1.astype(jnp.bfloat16),
                 preferred_element_type=jnp.float32)                      # (2ndf, T)

    if hw % tile != 0:
        last = pl.num_programs(1) - 1

        # Steady-state tiles: unmasked accumulation (no iota/compare/select cost).
        @pl.when(t != last)
        def _():
            sum_ref[...] += jnp.sum(h2, axis=1, keepdims=True)
            sumsq_ref[...] += jnp.sum(h2 * h2, axis=1, keepdims=True)

        # Final (partial) tile only: zero out columns past the true spatial extent.
        @pl.when(t == last)
        def _():
            col = t * tile + lax.broadcasted_iota(jnp.int32, h2.shape, 1)
            h2m = jnp.where(col < hw, h2, 0.0)
            sum_ref[...] += jnp.sum(h2m, axis=1, keepdims=True)
            sumsq_ref[...] += jnp.sum(h2m * h2m, axis=1, keepdims=True)
    else:
        sum_ref[...] += jnp.sum(h2, axis=1, keepdims=True)
        sumsq_ref[...] += jnp.sum(h2 * h2, axis=1, keepdims=True)


# ---------------------------------------------------------------------------
# Pass 2: recompute h1/h2 per tile, fold batch stats -> affine in-kernel (EUP rsqrt),
# apply BN + LeakyReLU and the 128->1 conv.  bf16 tail + MXU conv3 on v6e/v7x,
# f32 tail + VPU reduce on v5e.
# ---------------------------------------------------------------------------
def _apply_kernel(x_ref, w1_ref, b1_ref, w2_ref, sum_ref, sumsq_ref,
                  gamma_ref, beta_ref, w3_ref, o_ref, *, inv_m, bf16_tail):
    x = x_ref[...]                                                        # bf16 (C_in, T)
    h1 = jnp.dot(w1_ref[...], x, preferred_element_type=jnp.float32)      # (ndf,  T)
    h1 = _leaky_relu(h1 + b1_ref[...])
    h2 = jnp.dot(w2_ref[...], h1.astype(jnp.bfloat16),
                 preferred_element_type=jnp.float32)                      # (2ndf, T) f32

    # Fold global batch statistics into a per-channel affine (tiny; redundant per tile,
    # rsqrt goes to the otherwise-idle EUP slot).  Biased variance = torch training mode.
    mean = sum_ref[...] * inv_m
    var = jnp.maximum(sumsq_ref[...] * inv_m - mean * mean, 0.0)
    scale = gamma_ref[...] * lax.rsqrt(var + BN_EPS)
    shift = beta_ref[...] - mean * scale

    if bf16_tail:
        # v6e/v7x: bf16 VALU halves the elementwise-tail cost; conv3 (2ndf->1) rides the
        # under-filled MXU with f32 accumulation; output stays a lane-dense (1, T) row.
        h2 = _leaky_relu(h2.astype(jnp.bfloat16) * scale.astype(jnp.bfloat16)
                         + shift.astype(jnp.bfloat16))
        o_ref[...] = jnp.dot(w3_ref[...], h2, preferred_element_type=jnp.float32)
    else:
        # v5e: no bf16 VPU; f32 tail and conv3 as VPU broadcast-multiply + sublane reduce.
        h2 = _leaky_relu(h2 * scale + shift)
        o_ref[...] = jnp.sum(h2 * w3_ref[...], axis=0, keepdims=True)


# ---------------------------------------------------------------------------
# Wrapper
# ---------------------------------------------------------------------------
@functools.partial(jax.jit, static_argnames=("bf16_tail",))
def _forward(x_nchw, w1, b1, w2, gamma, beta, w3, *, bf16_tail):
    N, C, H, W = x_nchw.shape
    HW = H * W
    M = N * HW
    ndf = w1.shape[0]
    ndf2 = w2.shape[0]

    # Channel-major per image, pixels on the lane axis; single bf16 cast (halves x DMA).
    x3 = x_nchw.reshape(N, C, HW).astype(jnp.bfloat16)

    tile = _pick_tile(HW)
    n_t = pl.cdiv(HW, tile)
    grid = (N, n_t)

    w1_bf = w1.astype(jnp.bfloat16)                       # (ndf,  C_in)
    w2_bf = w2.astype(jnp.bfloat16)                       # (2ndf, ndf)
    b1c = b1.reshape(ndf, 1).astype(jnp.float32)
    gammac = gamma.reshape(ndf2, 1).astype(jnp.float32)
    betac = beta.reshape(ndf2, 1).astype(jnp.float32)
    if bf16_tail:
        w3c = w3.reshape(1, ndf2).astype(jnp.bfloat16)    # row operand for MXU conv3
    else:
        w3c = w3.reshape(ndf2, 1).astype(jnp.float32)     # column for the VPU reduce

    x_spec = pl.BlockSpec((None, C, tile), lambda n, t: (n, 0, t))

    def _const(shape):
        # Full-array block, constant index_map -> stays VMEM-resident, no per-step DMA.
        return pl.BlockSpec(shape, lambda n, t: (0, 0))

    w1_spec = _const((ndf, C))
    b1_spec = _const((ndf, 1))
    w2_spec = _const((ndf2, ndf))
    vec_spec = _const((ndf2, 1))
    w3_spec = _const(w3c.shape)

    mlp_flops = 2 * M * (C * ndf + ndf * ndf2)

    # ---- Pass 1: per-image per-channel sum / sumsq of h2 (megacore-able over N) ----
    part_sum, part_sumsq = pl.pallas_call(
        functools.partial(_stats_kernel, hw=HW, tile=tile),
        grid=grid,
        in_specs=[x_spec, w1_spec, b1_spec, w2_spec],
        out_specs=[pl.BlockSpec((None, ndf2, 1), lambda n, t: (n, 0, 0)),
                   pl.BlockSpec((None, ndf2, 1), lambda n, t: (n, 0, 0))],
        out_shape=[jax.ShapeDtypeStruct((N, ndf2, 1), jnp.float32),
                   jax.ShapeDtypeStruct((N, ndf2, 1), jnp.float32)],
        compiler_params=pltpu.CompilerParams(
            dimension_semantics=("parallel", "arbitrary"),  # per-image accumulator, race-free
            vmem_limit_bytes=_VMEM_LIMIT),
        cost_estimate=pl.CostEstimate(
            flops=mlp_flops + 4 * M * ndf2,
            transcendentals=0,
            bytes_accessed=M * C * 2 + 2 * N * ndf2 * 4),
    )(x3, w1_bf, b1c, w2_bf)

    # Tiny cross-image reduce; the mean/var -> scale/shift fold happens inside pass 2.
    ch_sum = jnp.sum(part_sum, axis=0)       # (2ndf, 1)
    ch_sumsq = jnp.sum(part_sumsq, axis=0)   # (2ndf, 1)

    # ---- Pass 2: recompute + fold BN + LeakyReLU + conv3, lane-dense output ----
    out3 = pl.pallas_call(
        functools.partial(_apply_kernel, inv_m=1.0 / M, bf16_tail=bf16_tail),
        grid=grid,
        in_specs=[x_spec, w1_spec, b1_spec, w2_spec,
                  vec_spec, vec_spec, vec_spec, vec_spec, w3_spec],
        out_specs=pl.BlockSpec((None, 1, tile), lambda n, t: (n, 0, t)),
        out_shape=jax.ShapeDtypeStruct((N, 1, HW), jnp.float32),
        compiler_params=pltpu.CompilerParams(
            dimension_semantics=("parallel", "parallel"),   # fully independent tiles (megacore)
            vmem_limit_bytes=_VMEM_LIMIT),
        cost_estimate=pl.CostEstimate(
            flops=mlp_flops + 8 * M * ndf2,
            transcendentals=N * n_t * ndf2,                 # per-tile rsqrt of the BN fold
            bytes_accessed=M * C * 2 + M * 4),
    )(x3, w1_bf, b1c, w2_bf, ch_sum, ch_sumsq, gammac, betac, w3c)

    return out3.reshape(N, 1, H, W)


def pixel_discriminator(x_nchw, w1, b1, w2, gamma, beta, w3):
    """Forward pass.  w1:(ndf,C_in)  b1:(ndf,)  w2:(2ndf,ndf)  gamma/beta:(2ndf,)  w3:(1,2ndf)."""
    return _forward(x_nchw, w1, b1, w2, gamma, beta, w3,
                    bf16_tail=_bf16_tail_supported())


# ---------------------------------------------------------------------------
# Pure-JAX f32 reference (same forward semantics) for correctness checking.
# ---------------------------------------------------------------------------
def reference(x_nchw, w1, b1, w2, gamma, beta, w3):
    N, C, H, W = x_nchw.shape
    xf = jnp.transpose(x_nchw, (0, 2, 3, 1)).reshape(N * H * W, C).astype(jnp.float32)
    h = _leaky_relu(xf @ w1.T + b1)
    h = h @ w2.T
    mean = jnp.mean(h, axis=0)
    var = jnp.mean((h - mean) ** 2, axis=0)
    h = (h - mean) / jnp.sqrt(var + BN_EPS) * gamma + beta
    h = _leaky_relu(h)
    o = h @ w3.T                                              # (M, 1)
    return jnp.transpose(o.reshape(N, H, W, 1), (0, 3, 1, 2))


if __name__ == "__main__":
    key = jax.random.PRNGKey(0)
    kx, kp = jax.random.split(key)

    N, C_in, H, W = 2, 4, 16, 16
    ndf = 64
    x = jax.random.normal(kx, (N, C_in, H, W), jnp.float32)

    k1, k2, k3, k4 = jax.random.split(kp, 4)
    # Weights in torch conv layout (out_ch, in_ch) [k=1 dims squeezed].
    w1 = jax.random.normal(k1, (ndf, C_in), jnp.float32) * 0.1
    b1 = jax.random.normal(k2, (ndf,), jnp.float32) * 0.1
    w2 = jax.random.normal(k3, (2 * ndf, ndf), jnp.float32) * 0.05
    gamma = jnp.ones((2 * ndf,), jnp.float32)                 # BatchNorm2d default affine init
    beta = jnp.zeros((2 * ndf,), jnp.float32)
    w3 = jax.random.normal(k4, (1, 2 * ndf), jnp.float32) * 0.05

    out = jax.block_until_ready(pixel_discriminator(x, w1, b1, w2, gamma, beta, w3))
    assert out.shape == (N, 1, H, W), out.shape

    ref = reference(x, w1, b1, w2, gamma, beta, w3)
    err_max = float(jnp.max(jnp.abs(out - ref)))
    err_mean = float(jnp.mean(jnp.abs(out - ref)))
    # Tolerance is loose vs the pure-f32 reference because conv1/conv2 use bf16 MXU operands
    # (f32 accumulate) and, on v6e/v7x, the elementwise tail runs in bf16 by design.
    assert err_max < 1e-1 and err_mean < 2.5e-2, (err_max, err_mean)

    print("KERNEL_OK")
</pallas_src>

<mosaic_0001>
module attributes {stable_mosaic.version = 11 : i64} {
  func.func @_stats_kernel(%arg0: i32, %arg1: i32, %arg2: memref<1x4x256xbf16, #tpu.memory_space<vmem>>, %arg3: memref<64x4xbf16, #tpu.memory_space<vmem>>, %arg4: memref<64x1xf32, #tpu.memory_space<vmem>>, %arg5: memref<128x64xbf16, #tpu.memory_space<vmem>>, %arg6: memref<1x128x1xf32, #tpu.memory_space<vmem>>, %arg7: memref<1x128x1xf32, #tpu.memory_space<vmem>>) attributes {dimension_semantics = [#tpu.dimension_semantics<parallel>, #tpu.dimension_semantics<arbitrary>], iteration_bounds = array<i64: 2, 1>, scalar_prefetch = 0 : i64, scratch_operands = 0 : i64, tpu.core_type = #tpu.core_type<tc>, window_params = [{transform_indices = @transform_0, window_bounds = array<i64: 1, 4, 256>}, {pipeline_mode = #tpu.pipeline_mode<synchronous>, transform_indices = @transform_1, window_bounds = array<i64: 64, 4>}, {pipeline_mode = #tpu.pipeline_mode<synchronous>, transform_indices = @transform_2, window_bounds = array<i64: 64, 1>}, {pipeline_mode = #tpu.pipeline_mode<synchronous>, transform_indices = @transform_3, window_bounds = array<i64: 128, 64>}, {transform_indices = @transform_4, window_bounds = array<i64: 1, 128, 1>}, {transform_indices = @transform_5, window_bounds = array<i64: 1, 128, 1>}]} {
    %c0_i32 = arith.constant 0 : i32
    %0 = arith.cmpi eq, %arg1, %c0_i32 : i32
    %1 = arith.extui %0 : i1 to i32
    %c0_i32_0 = arith.constant 0 : i32
    %2 = arith.cmpi ne, %1, %c0_i32_0 : i32
    scf.if %2 {
      %cst_25 = arith.constant 0.000000e+00 : f32
      %33 = vector.broadcast %cst_25 : f32 to vector<128x1xf32>
      %c0_26 = arith.constant 0 : index
      %c0_27 = arith.constant 0 : index
      %c0_28 = arith.constant 0 : index
      %34 = vector.load %arg6[%c0_26, %c0_27, %c0_28] : memref<1x128x1xf32, #tpu.memory_space<vmem>>, vector<1x128x1xf32>
      %35 = vector.shape_cast %34 : vector<1x128x1xf32> to vector<128x1xf32>
      %36 = vector.shape_cast %33 : vector<128x1xf32> to vector<1x128x1xf32>
      tpu.vector_store %arg6[%c0_26, %c0_27, %c0_28], %36 {strides = array<i32>} : memref<1x128x1xf32, #tpu.memory_space<vmem>>, vector<1x128x1xf32>,
      %cst_29 = arith.constant 0.000000e+00 : f32
      %37 = vector.broadcast %cst_29 : f32 to vector<128x1xf32>
      %c0_30 = arith.constant 0 : index
      %c0_31 = arith.constant 0 : index
      %c0_32 = arith.constant 0 : index
      %38 = vector.load %arg7[%c0_30, %c0_31, %c0_32] : memref<1x128x1xf32, #tpu.memory_space<vmem>>, vector<1x128x1xf32>
      %39 = vector.shape_cast %38 : vector<1x128x1xf32> to vector<128x1xf32>
      %40 = vector.shape_cast %37 : vector<128x1xf32> to vector<1x128x1xf32>
      tpu.vector_store %arg7[%c0_30, %c0_31, %c0_32], %40 {strides = array<i32>} : memref<1x128x1xf32, #tpu.memory_space<vmem>>, vector<1x128x1xf32>,
    } else {
    }
    %c0 = arith.constant 0 : index
    %c0_1 = arith.constant 0 : index
    %c0_2 = arith.constant 0 : index
    %3 = vector.load %arg2[%c0, %c0_1, %c0_2] : memref<1x4x256xbf16, #tpu.memory_space<vmem>>, vector<1x4x256xbf16>
    %4 = vector.shape_cast %3 : vector<1x4x256xbf16> to vector<4x256xbf16>
    %c0_3 = arith.constant 0 : index
    %c0_4 = arith.constant 0 : index
    %5 = vector.load %arg3[%c0_3, %c0_4] : memref<64x4xbf16, #tpu.memory_space<vmem>>, vector<64x4xbf16>
    %cst = arith.constant dense<0.000000e+00> : vector<64x256xf32>
    %6 = tpu.matmul %5, %4, %cst {dimension_numbers = #tpu.dot_dimension_numbers<[1], [0], [0], [1], [0, 0, 1, 1], [], []>} : vector<64x4xbf16>, vector<4x256xbf16>, vector<64x256xf32> -> vector<64x256xf32>
    %c0_5 = arith.constant 0 : index
    %c0_6 = arith.constant 0 : index
    %7 = vector.load %arg4[%c0_5, %c0_6] : memref<64x1xf32, #tpu.memory_space<vmem>>, vector<64x1xf32>
    %8 = vector.broadcast %7 : vector<64x1xf32> to vector<64x256xf32>
    %9 = arith.addf %6, %8 : vector<64x256xf32>
    %cst_7 = arith.constant 2.000000e-01 : f32
    %10 = vector.broadcast %cst_7 : f32 to vector<64x256xf32>
    %11 = arith.mulf %10, %9 : vector<64x256xf32>
    %12 = arith.maximumf %9, %11 : vector<64x256xf32>
    %c0_8 = arith.constant 0 : index
    %c0_9 = arith.constant 0 : index
    %13 = vector.load %arg5[%c0_8, %c0_9] : memref<128x64xbf16, #tpu.memory_space<vmem>>, vector<128x64xbf16>
    %14 = arith.truncf %12 : vector<64x256xf32> to vector<64x256xbf16>
    %cst_10 = arith.constant dense<0.000000e+00> : vector<128x256xf32>
    %15 = tpu.matmul %13, %14, %cst_10 {dimension_numbers = #tpu.dot_dimension_numbers<[1], [0], [0], [1], [0, 0, 1, 1], [], []>} : vector<128x64xbf16>, vector<64x256xbf16>, vector<128x256xf32> -> vector<128x256xf32>
    %c0_11 = arith.constant 0 : index
    %c0_12 = arith.constant 0 : index
    %c0_13 = arith.constant 0 : index
    %16 = vector.load %arg6[%c0_11, %c0_12, %c0_13] : memref<1x128x1xf32, #tpu.memory_space<vmem>>, vector<1x128x1xf32>
    %17 = vector.shape_cast %16 : vector<1x128x1xf32> to vector<128x1xf32>
    %cst_14 = arith.constant dense<0.000000e+00> : vector<128xf32>
    %18 = vector.multi_reduction <add>, %15, %cst_14 [1] : vector<128x256xf32> to vector<128xf32>
    %19 = vector.shape_cast %18 : vector<128xf32> to vector<128x1xf32>
    %20 = arith.addf %17, %19 : vector<128x1xf32>
    %c0_15 = arith.constant 0 : index
    %c0_16 = arith.constant 0 : index
    %c0_17 = arith.constant 0 : index
    %21 = vector.load %arg6[%c0_15, %c0_16, %c0_17] : memref<1x128x1xf32, #tpu.memory_space<vmem>>, vector<1x128x1xf32>
    %22 = vector.shape_cast %21 : vector<1x128x1xf32> to vector<128x1xf32>
    %23 = vector.shape_cast %20 : vector<128x1xf32> to vector<1x128x1xf32>
    tpu.vector_store %arg6[%c0_15, %c0_16, %c0_17], %23 {strides = array<i32>} : memref<1x128x1xf32, #tpu.memory_space<vmem>>, vector<1x128x1xf32>,
    %c0_18 = arith.constant 0 : index
    %c0_19 = arith.constant 0 : index
    %c0_20 = arith.constant 0 : index
    %24 = vector.load %arg7[%c0_18, %c0_19, %c0_20] : memref<1x128x1xf32, #tpu.memory_space<vmem>>, vector<1x128x1xf32>
    %25 = vector.shape_cast %24 : vector<1x128x1xf32> to vector<128x1xf32>
    %26 = arith.mulf %15, %15 : vector<128x256xf32>
    %cst_21 = arith.constant dense<0.000000e+00> : vector<128xf32>
    %27 = vector.multi_reduction <add>, %26, %cst_21 [1] : vector<128x256xf32> to vector<128xf32>
    %28 = vector.shape_cast %27 : vector<128xf32> to vector<128x1xf32>
    %29 = arith.addf %25, %28 : vector<128x1xf32>
    %c0_22 = arith.constant 0 : index
    %c0_23 = arith.constant 0 : index
    %c0_24 = arith.constant 0 : index
    %30 = vector.load %arg7[%c0_22, %c0_23, %c0_24] : memref<1x128x1xf32, #tpu.memory_space<vmem>>, vector<1x128x1xf32>
    %31 = vector.shape_cast %30 : vector<1x128x1xf32> to vector<128x1xf32>
    %32 = vector.shape_cast %29 : vector<128x1xf32> to vector<1x128x1xf32>
    tpu.vector_store %arg7[%c0_22, %c0_23, %c0_24], %32 {strides = array<i32>} : memref<1x128x1xf32, #tpu.memory_space<vmem>>, vector<1x128x1xf32>,
    return
  }
  func.func @transform_0(%arg0: i32, %arg1: i32) -> (i32, i32, i32) {
    %c0_i32 = arith.constant 0 : i32
    %c0_i32_0 = arith.constant 0 : i32
    return %arg0, %c0_i32, %arg1 : i32, i32, i32
  }
  func.func @transform_1(%arg0: i32, %arg1: i32) -> (i32, i32) {
    %c0_i32 = arith.constant 0 : i32
    %c0_i32_0 = arith.constant 0 : i32
    %c0_i32_1 = arith.constant 0 : i32
    return %c0_i32, %c0_i32_0 : i32, i32
  }
  func.func @transform_2(%arg0: i32, %arg1: i32) -> (i32, i32) {
    %c0_i32 = arith.constant 0 : i32
    %c0_i32_0 = arith.constant 0 : i32
    %c0_i32_1 = arith.constant 0 : i32
    return %c0_i32, %c0_i32_0 : i32, i32
  }
  func.func @transform_3(%arg0: i32, %arg1: i32) -> (i32, i32) {
    %c0_i32 = arith.constant 0 : i32
    %c0_i32_0 = arith.constant 0 : i32
    %c0_i32_1 = arith.constant 0 : i32
    return %c0_i32, %c0_i32_0 : i32, i32
  }
  func.func @transform_4(%arg0: i32, %arg1: i32) -> (i32, i32, i32) {
    %c0_i32 = arith.constant 0 : i32
    %c0_i32_0 = arith.constant 0 : i32
    %c0_i32_1 = arith.constant 0 : i32
    return %arg0, %c0_i32, %c0_i32_0 : i32, i32, i32
  }
  func.func @transform_5(%arg0: i32, %arg1: i32) -> (i32, i32, i32) {
    %c0_i32 = arith.constant 0 : i32
    %c0_i32_0 = arith.constant 0 : i32
    %c0_i32_1 = arith.constant 0 : i32
    return %arg0, %c0_i32, %c0_i32_0 : i32, i32, i32
  }
}

module attributes {stable_mosaic.version = 11 : i64} {
  func.func @_apply_kernel(%arg0: i32, %arg1: i32, %arg2: memref<1x4x256xbf16, #tpu.memory_space<vmem>>, %arg3: memref<64x4xbf16, #tpu.memory_space<vmem>>, %arg4: memref<64x1xf32, #tpu.memory_space<vmem>>, %arg5: memref<128x64xbf16, #tpu.memory_space<vmem>>, %arg6: memref<128x1xf32, #tpu.memory_space<vmem>>, %arg7: memref<128x1xf32, #tpu.memory_space<vmem>>, %arg8: memref<128x1xf32, #tpu.memory_space<vmem>>, %arg9: memref<128x1xf32, #tpu.memory_space<vmem>>, %arg10: memref<1x128xbf16, #tpu.memory_space<vmem>>, %arg11: memref<1x1x256xf32, #tpu.memory_space<vmem>>) attributes {dimension_semantics = [#tpu.dimension_semantics<parallel>, #tpu.dimension_semantics<parallel>], iteration_bounds = array<i64: 2, 1>, scalar_prefetch = 0 : i64, scratch_operands = 0 : i64, tpu.core_type = #tpu.core_type<tc>, window_params = [{transform_indices = @transform_0, window_bounds = array<i64: 1, 4, 256>}, {pipeline_mode = #tpu.pipeline_mode<synchronous>, transform_indices = @transform_1, window_bounds = array<i64: 64, 4>}, {pipeline_mode = #tpu.pipeline_mode<synchronous>, transform_indices = @transform_2, window_bounds = array<i64: 64, 1>}, {pipeline_mode = #tpu.pipeline_mode<synchronous>, transform_indices = @transform_3, window_bounds = array<i64: 128, 64>}, {pipeline_mode = #tpu.pipeline_mode<synchronous>, transform_indices = @transform_4, window_bounds = array<i64: 128, 1>}, {pipeline_mode = #tpu.pipeline_mode<synchronous>, transform_indices = @transform_5, window_bounds = array<i64: 128, 1>}, {pipeline_mode = #tpu.pipeline_mode<synchronous>, transform_indices = @transform_6, window_bounds = array<i64: 128, 1>}, {pipeline_mode = #tpu.pipeline_mode<synchronous>, transform_indices = @transform_7, window_bounds = array<i64: 128, 1>}, {pipeline_mode = #tpu.pipeline_mode<synchronous>, transform_indices = @transform_8, window_bounds = array<i64: 1, 128>}, {transform_indices = @transform_9, window_bounds = array<i64: 1, 1, 256>}]} {
    %c0 = arith.constant 0 : index
    %c0_0 = arith.constant 0 : index
    %c0_1 = arith.constant 0 : index
    %0 = vector.load %arg2[%c0, %c0_0, %c0_1] : memref<1x4x256xbf16, #tpu.memory_space<vmem>>, vector<1x4x256xbf16>
    %1 = vector.shape_cast %0 : vector<1x4x256xbf16> to vector<4x256xbf16>
    %c0_2 = arith.constant 0 : index
    %c0_3 = arith.constant 0 : index
    %2 = vector.load %arg3[%c0_2, %c0_3] : memref<64x4xbf16, #tpu.memory_space<vmem>>, vector<64x4xbf16>
    %cst = arith.constant dense<0.000000e+00> : vector<64x256xf32>
    %3 = tpu.matmul %2, %1, %cst {dimension_numbers = #tpu.dot_dimension_numbers<[1], [0], [0], [1], [0, 0, 1, 1], [], []>} : vector<64x4xbf16>, vector<4x256xbf16>, vector<64x256xf32> -> vector<64x256xf32>
    %c0_4 = arith.constant 0 : index
    %c0_5 = arith.constant 0 : index
    %4 = vector.load %arg4[%c0_4, %c0_5] : memref<64x1xf32, #tpu.memory_space<vmem>>, vector<64x1xf32>
    %5 = vector.broadcast %4 : vector<64x1xf32> to vector<64x256xf32>
    %6 = arith.addf %3, %5 : vector<64x256xf32>
    %cst_6 = arith.constant 2.000000e-01 : f32
    %7 = vector.broadcast %cst_6 : f32 to vector<64x256xf32>
    %8 = arith.mulf %7, %6 : vector<64x256xf32>
    %9 = arith.maximumf %6, %8 : vector<64x256xf32>
    %c0_7 = arith.constant 0 : index
    %c0_8 = arith.constant 0 : index
    %10 = vector.load %arg5[%c0_7, %c0_8] : memref<128x64xbf16, #tpu.memory_space<vmem>>, vector<128x64xbf16>
    %11 = arith.truncf %9 : vector<64x256xf32> to vector<64x256xbf16>
    %cst_9 = arith.constant dense<0.000000e+00> : vector<128x256xf32>
    %12 = tpu.matmul %10, %11, %cst_9 {dimension_numbers = #tpu.dot_dimension_numbers<[1], [0], [0], [1], [0, 0, 1, 1], [], []>} : vector<128x64xbf16>, vector<64x256xbf16>, vector<128x256xf32> -> vector<128x256xf32>
    %c0_10 = arith.constant 0 : index
    %c0_11 = arith.constant 0 : index
    %13 = vector.load %arg6[%c0_10, %c0_11] : memref<128x1xf32, #tpu.memory_space<vmem>>, vector<128x1xf32>
    %cst_12 = arith.constant 0.001953125 : f32
    %14 = vector.broadcast %cst_12 : f32 to vector<128x1xf32>
    %15 = arith.mulf %13, %14 : vector<128x1xf32>
    %c0_13 = arith.constant 0 : index
    %c0_14 = arith.constant 0 : index
    %16 = vector.load %arg7[%c0_13, %c0_14] : memref<128x1xf32, #tpu.memory_space<vmem>>, vector<128x1xf32>
    %cst_15 = arith.constant 0.001953125 : f32
    %17 = vector.broadcast %cst_15 : f32 to vector<128x1xf32>
    %18 = arith.mulf %16, %17 : vector<128x1xf32>
    %19 = arith.mulf %15, %15 : vector<128x1xf32>
    %20 = arith.subf %18, %19 : vector<128x1xf32>
    %cst_16 = arith.constant 0.000000e+00 : f32
    %21 = vector.broadcast %cst_16 : f32 to vector<128x1xf32>
    %22 = arith.maximumf %20, %21 : vector<128x1xf32>
    %c0_17 = arith.constant 0 : index
    %c0_18 = arith.constant 0 : index
    %23 = vector.load %arg8[%c0_17, %c0_18] : memref<128x1xf32, #tpu.memory_space<vmem>>, vector<128x1xf32>
    %cst_19 = arith.constant 9.99999974E-6 : f32
    %24 = vector.broadcast %cst_19 : f32 to vector<128x1xf32>
    %25 = arith.addf %22, %24 : vector<128x1xf32>
    %26 = math.rsqrt %25 : vector<128x1xf32>
    %27 = arith.mulf %23, %26 : vector<128x1xf32>
    %c0_20 = arith.constant 0 : index
    %c0_21 = arith.constant 0 : index
    %28 = vector.load %arg9[%c0_20, %c0_21] : memref<128x1xf32, #tpu.memory_space<vmem>>, vector<128x1xf32>
    %29 = arith.mulf %15, %27 : vector<128x1xf32>
    %30 = arith.subf %28, %29 : vector<128x1xf32>
    %31 = arith.truncf %12 : vector<128x256xf32> to vector<128x256xbf16>
    %32 = arith.truncf %27 : vector<128x1xf32> to vector<128x1xbf16>
    %33 = vector.broadcast %32 : vector<128x1xbf16> to vector<128x256xbf16>
    %34 = arith.mulf %31, %33 : vector<128x256xbf16>
    %35 = arith.truncf %30 : vector<128x1xf32> to vector<128x1xbf16>
    %36 = vector.broadcast %35 : vector<128x1xbf16> to vector<128x256xbf16>
    %37 = arith.addf %34, %36 : vector<128x256xbf16>
    %cst_22 = arith.constant 2.001950e-01 : bf16
    %38 = vector.broadcast %cst_22 : bf16 to vector<128x256xbf16>
    %39 = arith.mulf %38, %37 : vector<128x256xbf16>
    %40 = arith.maximumf %37, %39 : vector<128x256xbf16>
    %c0_23 = arith.constant 0 : index
    %c0_24 = arith.constant 0 : index
    %41 = vector.load %arg10[%c0_23, %c0_24] : memref<1x128xbf16, #tpu.memory_space<vmem>>, vector<1x128xbf16>
    %cst_25 = arith.constant dense<0.000000e+00> : vector<1x256xf32>
    %42 = tpu.matmul %41, %40, %cst_25 {dimension_numbers = #tpu.dot_dimension_numbers<[1], [0], [0], [1], [0, 0, 1, 1], [], []>} : vector<1x128xbf16>, vector<128x256xbf16>, vector<1x256xf32> -> vector<1x256xf32>
    %c0_26 = arith.constant 0 : index
    %c0_27 = arith.constant 0 : index
    %c0_28 = arith.constant 0 : index
    %43 = vector.load %arg11[%c0_26, %c0_27, %c0_28] : memref<1x1x256xf32, #tpu.memory_space<vmem>>, vector<1x1x256xf32>
    %44 = vector.shape_cast %43 : vector<1x1x256xf32> to vector<1x256xf32>
    %45 = vector.shape_cast %42 : vector<1x256xf32> to vector<1x1x256xf32>
    tpu.vector_store %arg11[%c0_26, %c0_27, %c0_28], %45 {strides = array<i32>} : memref<1x1x256xf32, #tpu.memory_space<vmem>>, vector<1x1x256xf32>,
    return
  }
  func.func @transform_0(%arg0: i32, %arg1: i32) -> (i32, i32, i32) {
    %c0_i32 = arith.constant 0 : i32
    %c0_i32_0 = arith.constant 0 : i32
    return %arg0, %c0_i32, %arg1 : i32, i32, i32
  }
  func.func @transform_1(%arg0: i32, %arg1: i32) -> (i32, i32) {
    %c0_i32 = arith.constant 0 : i32
    %c0_i32_0 = arith.constant 0 : i32
    %c0_i32_1 = arith.constant 0 : i32
    return %c0_i32, %c0_i32_0 : i32, i32
  }
  func.func @transform_2(%arg0: i32, %arg1: i32) -> (i32, i32) {
    %c0_i32 = arith.constant 0 : i32
    %c0_i32_0 = arith.constant 0 : i32
    %c0_i32_1 = arith.constant 0 : i32
    return %c0_i32, %c0_i32_0 : i32, i32
  }
  func.func @transform_3(%arg0: i32, %arg1: i32) -> (i32, i32) {
    %c0_i32 = arith.constant 0 : i32
    %c0_i32_0 = arith.constant 0 : i32
    %c0_i32_1 = arith.constant 0 : i32
    return %c0_i32, %c0_i32_0 : i32, i32
  }
  func.func @transform_4(%arg0: i32, %arg1: i32) -> (i32, i32) {
    %c0_i32 = arith.constant 0 : i32
    %c0_i32_0 = arith.constant 0 : i32
    %c0_i32_1 = arith.constant 0 : i32
    return %c0_i32, %c0_i32_0 : i32, i32
  }
  func.func @transform_5(%arg0: i32, %arg1: i32) -> (i32, i32) {
    %c0_i32 = arith.constant 0 : i32
    %c0_i32_0 = arith.constant 0 : i32
    %c0_i32_1 = arith.constant 0 : i32
    return %c0_i32, %c0_i32_0 : i32, i32
  }
  func.func @transform_6(%arg0: i32, %arg1: i32) -> (i32, i32) {
    %c0_i32 = arith.constant 0 : i32
    %c0_i32_0 = arith.constant 0 : i32
    %c0_i32_1 = arith.constant 0 : i32
    return %c0_i32, %c0_i32_0 : i32, i32
  }
  func.func @transform_7(%arg0: i32, %arg1: i32) -> (i32, i32) {
    %c0_i32 = arith.constant 0 : i32
    %c0_i32_0 = arith.constant 0 : i32
    %c0_i32_1 = arith.constant 0 : i32
    return %c0_i32, %c0_i32_0 : i32, i32
  }
  func.func @transform_8(%arg0: i32, %arg1: i32) -> (i32, i32) {
    %c0_i32 = arith.constant 0 : i32
    %c0_i32_0 = arith.constant 0 : i32
    %c0_i32_1 = arith.constant 0 : i32
    return %c0_i32, %c0_i32_0 : i32, i32
  }
  func.func @transform_9(%arg0: i32, %arg1: i32) -> (i32, i32, i32) {
    %c0_i32 = arith.constant 0 : i32
    %c0_i32_0 = arith.constant 0 : i32
    return %arg0, %c0_i32, %arg1 : i32, i32, i32
  }
}

</mosaic_0001>

<llo_original>
// kernel: _forward.2
$region0: #{_forward.2}
  #allocation0 [shape = 'u32[]', space=smem, size = 0x4, offset = 0x4, fixed_abs, tag = 'smem constant byte address 0x4 - core index']
  #allocation1 [shape = 'u32[144,128]{1,0:T(1,128)}', space=vmem, size = 0x12000, scoped, tag = 'internal scratch']
  %s0 = inlined_call_operand.vmem [shape: bf16[2,4,256], index: 0, kind: input, shape index: {}]
  %s1 = inlined_call_operand.vmem [shape: bf16[64,4], index: 1, kind: input, shape index: {}]
  %s2 = inlined_call_operand.vmem [shape: f32[64,1], index: 2, kind: input, shape index: {}]
  %s3 = inlined_call_operand.vmem [shape: bf16[128,64], index: 3, kind: input, shape index: {}]
  %s4 = inlined_call_operand.vmem [shape: f32[2,128,1], index: 4, kind: output, shape index: {0}]
  %s5 = inlined_call_operand.vmem [shape: f32[2,128,1], index: 5, kind: output, shape index: {1}]
  %6 = xla_tuple %s4, %s5
  %s7 = sld [smem:[#allocation0]]
  $region61: #{_forward.2} parent=0
    _
  %s9 = ssub.s32 1, %s7
  %s10 = scalar_select 0, %s9, %s7
  loop: start=0, step=1, limit=4
  $region2: #{_forward.2} parent=0 // loop_pre_header
    _
  $region3: #{_forward.2} parent=0 // loop_header
    %s12 = sphi 0, %s16
    %p13 = scmp.ge.s32.totalorder %s12, 4
    %s19 = sphi 0, %s31
    %s20 = sphi 0, %s27
    %s21 = sphi 0, %s19
    %s22 = sphi 0, %s20
    %s23 = sphi 0, %s21
    %s24 = sphi 0, %s22
    %s36 = sphi 0, %s38
    %s39 = sphi 0, %s36
    %s40 = sphi 0, %s39
    %s56 = sphi 0, %s40
    %s60 = sphi 0, %s60
    %s62 = sphi 0, %s60
    %s63 = sphi 0, %s62
    %s77 = sphi 0, %s63
    %s81 = sphi 0, %s81
    %s83 = sphi 0, %s81
    %s84 = sphi 0, %s83
    %s98 = sphi 0, %s84
    %s102 = sphi 0, %s102
    %s104 = sphi 0, %s102
    %s105 = sphi 0, %s104
    %s119 = sphi 0, %s105
    %s125 = sphi 0, %s127
    %s128 = sphi 0, %s125
    %s129 = sphi 0, %s128
    %s145 = sphi 0, %s129
    %s151 = sphi 0, %s153
    %s154 = sphi 0, %s151
    %s155 = sphi 0, %s154
    %s171 = sphi 0, %s155
  $region4: #{_forward.2} parent=0 // loop_header_branch
    %15 = sbr.rel (%p13) target = $region8
  $region5: #{_forward.2} parent=0 // loop_body
    %s17 = ssub.s32 %s12, 1
    %s18 = ssub.s32 %s12, 2
    %s25 = sadd.s32 1, %s20
    %p26 = scmp.ge.s32.totalorder %s25, 1
    %s27 = scalar_select %p26, 0, %s25
    %s28 = sadd.s32 1, %s19
    %s29 = scalar_select %p26, %s28, %s19
    %p30 = scmp.ge.s32.totalorder %s29, 2
    %s31 = scalar_select %p30, 0, %s29
    %s32 = ssub.s32 %s19, %s31
    %s33 = ssub.s32 %s20, %s27
    %s34 = sor.u32 %s32, %s33
    %p35 = scmp.eq.s32.totalorder %s34, 0
    %s37 = sadd.s32 %s36, 1
    %s38 = scalar_select %p35, %s36, %s37
    %p41 = pneg %p35
    %p42 = scmp.eq.s32.totalorder %s12, 1
    %p43 = por %p41, %p42
    %p44 = scmp.ne.s32.totalorder %s36, %s39
    %p45 = scmp.eq.s32.totalorder %s12, 0
    %p46 = por %p44, %p45
    %p47 = scmp.ne.s32.totalorder %s36, %s39
    %p48 = scmp.eq.s32.totalorder %s17, 1
    %p49 = por %p47, %p48
    %p50 = scmp.ne.s32.totalorder %s39, %s40
    %p51 = scmp.eq.s32.totalorder %s17, 0
    %p52 = por %p50, %p51
    %p53 = scmp.ne.s32.totalorder %s39, %s40
    %p54 = scmp.eq.s32.totalorder %s18, 1
    %p55 = por %p53, %p54
    %p57 = scmp.ne.s32.totalorder %s40, %s56
    %p58 = scmp.eq.s32.totalorder %s18, 0
    %p59 = por %p57, %p58
    %s61 = sadd.s32 %s60, 1
    %p64 = scmp.eq.s32.totalorder %s12, 1
    %p65 = scmp.ne.s32.totalorder %s60, %s62
    %p66 = scmp.eq.s32.totalorder %s12, 0
    %p67 = por %p65, %p66
    %p68 = scmp.ne.s32.totalorder %s60, %s62
    %p69 = scmp.eq.s32.totalorder %s17, 1
    %p70 = por %p68, %p69
    %p71 = scmp.ne.s32.totalorder %s62, %s63
    %p72 = scmp.eq.s32.totalorder %s17, 0
    %p73 = por %p71, %p72
    %p74 = scmp.ne.s32.totalorder %s62, %s63
    %p75 = scmp.eq.s32.totalorder %s18, 1
    %p76 = por %p74, %p75
    %p78 = scmp.ne.s32.totalorder %s63, %s77
    %p79 = scmp.eq.s32.totalorder %s18, 0
    %p80 = por %p78, %p79
    %s82 = sadd.s32 %s81, 1
    %p85 = scmp.eq.s32.totalorder %s12, 1
    %p86 = scmp.ne.s32.totalorder %s81, %s83
    %p87 = scmp.eq.s32.totalorder %s12, 0
    %p88 = por %p86, %p87
    %p89 = scmp.ne.s32.totalorder %s81, %s83
    %p90 = scmp.eq.s32.totalorder %s17, 1
    %p91 = por %p89, %p90
    %p92 = scmp.ne.s32.totalorder %s83, %s84
    %p93 = scmp.eq.s32.totalorder %s17, 0
    %p94 = por %p92, %p93
    %p95 = scmp.ne.s32.totalorder %s83, %s84
    %p96 = scmp.eq.s32.totalorder %s18, 1
    %p97 = por %p95, %p96
    %p99 = scmp.ne.s32.totalorder %s84, %s98
    %p100 = scmp.eq.s32.totalorder %s18, 0
    %p101 = por %p99, %p100
    %s103 = sadd.s32 %s102, 1
    %p106 = scmp.eq.s32.totalorder %s12, 1
    %p107 = scmp.ne.s32.totalorder %s102, %s104
    %p108 = scmp.eq.s32.totalorder %s12, 0
    %p109 = por %p107, %p108
    %p110 = scmp.ne.s32.totalorder %s102, %s104
    %p111 = scmp.eq.s32.totalorder %s17, 1
    %p112 = por %p110, %p111
    %p113 = scmp.ne.s32.totalorder %s104, %s105
    %p114 = scmp.eq.s32.totalorder %s17, 0
    %p115 = por %p113, %p114
    %p116 = scmp.ne.s32.totalorder %s104, %s105
    %p117 = scmp.eq.s32.totalorder %s18, 1
    %p118 = por %p116, %p117
    %p120 = scmp.ne.s32.totalorder %s105, %s119
    %p121 = scmp.eq.s32.totalorder %s18, 0
    %p122 = por %p120, %p121
    %s123 = ssub.s32 %s19, %s31
    %p124 = scmp.eq.s32.totalorder %s123, 0
    %s126 = sadd.s32 %s125, 1
    %s127 = scalar_select %p124, %s125, %s126
    %p130 = pneg %p124
    %p131 = scmp.eq.s32.totalorder %s12, 1
    %p132 = por %p130, %p131
    %p133 = scmp.ne.s32.totalorder %s125, %s128
    %p134 = scmp.eq.s32.totalorder %s12, 0
    %p135 = por %p133, %p134
    %p136 = scmp.ne.s32.totalorder %s125, %s128
    %p137 = scmp.eq.s32.totalorder %s17, 1
    %p138 = por %p136, %p137
    %p139 = scmp.ne.s32.totalorder %s128, %s129
    %p140 = scmp.eq.s32.totalorder %s17, 0
    %p141 = por %p139, %p140
    %p142 = scmp.ne.s32.totalorder %s128, %s129
    %p143 = scmp.eq.s32.totalorder %s18, 1
    %p144 = por %p142, %p143
    %p146 = scmp.ne.s32.totalorder %s129, %s145
    %p147 = scmp.eq.s32.totalorder %s18, 0
    %p148 = por %p146, %p147
    %s149 = ssub.s32 %s19, %s31
    %p150 = scmp.eq.s32.totalorder %s149, 0
    %s152 = sadd.s32 %s151, 1
    %s153 = scalar_select %p150, %s151, %s152
    %p156 = pneg %p150
    %p157 = scmp.eq.s32.totalorder %s12, 1
    %p158 = por %p156, %p157
    %p159 = scmp.ne.s32.totalorder %s151, %s154
    %p160 = scmp.eq.s32.totalorder %s12, 0
    %p161 = por %p159, %p160
    %p162 = scmp.ne.s32.totalorder %s151, %s154
    %p163 = scmp.eq.s32.totalorder %s17, 1
    %p164 = por %p162, %p163
    %p165 = scmp.ne.s32.totalorder %s154, %s155
    %p166 = scmp.eq.s32.totalorder %s17, 0
    %p167 = por %p165, %p166
    %p168 = scmp.ne.s32.totalorder %s154, %s155
    %p169 = scmp.eq.s32.totalorder %s18, 1
    %p170 = por %p168, %p169
    %p172 = scmp.ne.s32.totalorder %s155, %s171
    %p173 = scmp.eq.s32.totalorder %s18, 0
    %p174 = por %p172, %p173
    %p175 = scmp.le.s32.totalorder 1, %s12
    %p176 = scmp.lt.s32.totalorder %s12, 3
    %p177 = pnand %p175, %p176
    %p178 = pneg %p177
    // Predicated region
    $region9: #{_forward.2} parent=5 // pred_check
      _
    $region10: #{_forward.2} parent=5 // pred_check_branch
      %180 = sbr.rel (%p177) target = $region12
    $region11: #{_forward.2} parent=5 // pred_region
      %s181 = ssub.s32 %s12, 1
      // Predicated region
      $region13: #{_forward.2} parent=11 // pred_check
        %p182 = pneg %p73
      $region14: #{_forward.2} parent=11 // pred_check_branch
        %184 = sbr.rel (%p182) target = $region16
      $region15: #{_forward.2} parent=11 // pred_region
        _
      $region16: #{_forward.2} parent=11 // pred_fallthru
        _
      // Predicated region
      $region17: #{_forward.2} parent=11 // pred_check
        %p185 = pneg %p94
      $region18: #{_forward.2} parent=11 // pred_check_branch
        %187 = sbr.rel (%p185) target = $region20
      $region19: #{_forward.2} parent=11 // pred_region
        _
      $region20: #{_forward.2} parent=11 // pred_fallthru
        _
      // Predicated region
      $region21: #{_forward.2} parent=11 // pred_check
        %p188 = pneg %p115
      $region22: #{_forward.2} parent=11 // pred_check_branch
        %190 = sbr.rel (%p188) target = $region24
      $region23: #{_forward.2} parent=11 // pred_region
        _
      $region24: #{_forward.2} parent=11 // pred_fallthru
        _
    $region12: #{_forward.2} parent=5 // pred_fallthru
      _
    %p191 = scmp.lt.s32.totalorder %s12, 2
    // Predicated region
    $region25: #{_forward.2} parent=5 // pred_check
      %p192 = pneg %p191
    $region26: #{_forward.2} parent=5 // pred_check_branch
      %194 = sbr.rel (%p192) target = $region28
    $region27: #{_forward.2} parent=5 // pred_region
      // Predicated region
      $region29: #{_forward.2} parent=27 // pred_check
        %p195 = pneg %p46
      $region30: #{_forward.2} parent=27 // pred_check_branch
        %197 = sbr.rel (%p195) target = $region32
      $region31: #{_forward.2} parent=27 // pred_region
        %s198 = smul.u32 2, %s20
        %p199 = scmp.lt.s32.totalorder %s19, 1
        %s200 = scalar_select %p199, %s19, 1
        %p201 = scmp.lt.s32.totalorder %s198, 1
        %s202 = scalar_select %p201, %s198, 1
        %s203 = smul.addr %s200, 2
        %s204 = sadd.s32 %s202, %s203
        %s205 = smul.addr %s204, 2
        %s206 = scalar_lea.vmem %s0, %s205
        %s207 = smul.u32 2, %s20
      $region32: #{_forward.2} parent=27 // pred_fallthru
        _
    $region28: #{_forward.2} parent=5 // pred_fallthru
      _
    %p208 = scmp.le.s32.totalorder 1, %s12
    %p209 = scmp.lt.s32.totalorder %s12, 3
    %p210 = pnand %p208, %p209
    %p211 = pneg %p210
    // Predicated region
    $region33: #{_forward.2} parent=5 // pred_check
      _
    $region34: #{_forward.2} parent=5 // pred_check_branch
      %213 = sbr.rel (%p210) target = $region36
    $region35: #{_forward.2} parent=5 // pred_region
      %s214 = ssub.s32 %s12, 1
      %s215 = smul.u32 2, %s22
      %p216 = scmp.lt.s32.totalorder %s21, 1
      %s217 = scalar_select %p216, %s21, 1
      %p218 = scmp.lt.s32.totalorder %s215, 1
      %s219 = scalar_select %p218, %s215, 1
      %s220 = smul.addr %s217, 2
      %s221 = sadd.s32 %s219, %s220
      %s222 = smul.addr %s221, 2
      %s223 = scalar_lea.vmem %s0, %s222
      %p224 = pneg %p52
      %p225 = pneg %p49
      %p226 = pneg %p73
      %p227 = pneg %p70
      %p228 = pneg %p94
      %p229 = pneg %p91
      %p230 = pneg %p115
      %p231 = pneg %p112
      %p232 = pneg %p141
      %p233 = pneg %p138
      %p234 = scmp.lt.s32.totalorder %s21, 1
      %s235 = scalar_select %p234, %s21, 1
      %s236 = smul.addr %s235, 16
      %s237 = smul.addr %s236, 8
      %s238 = scalar_lea.vmem %s4, %s237
      %p239 = pneg %p167
      %p240 = pneg %p164
      %p241 = scmp.lt.s32.totalorder %s21, 1
      %s242 = scalar_select %p241, %s21, 1
      %s243 = smul.addr %s242, 16
      %s244 = smul.addr %s243, 8
      %s245 = scalar_lea.vmem %s5, %s244
      %s246 = smul.u32 2, %s22
      %p247 = scmp.lt.s32.totalorder %s21, 1
      %s248 = scalar_select %p247, %s21, 1
      %p249 = scmp.lt.s32.totalorder %s246, 1
      %s250 = scalar_select %p249, %s246, 1
      %s251 = smul.addr %s248, 2
      %s252 = sadd.s32 %s250, %s251
      %s253 = smul.addr %s252, 2
      %s254 = scalar_lea.vmem %s0, %s253
      %s255 = smul.u32 2, %s22
      %p256 = scmp.lt.s32.totalorder %s21, 1
      %s257 = scalar_select %p256, %s21, 1
      %s258 = smul.addr %s257, 16
      %s259 = smul.addr %s258, 8
      %s260 = scalar_lea.vmem %s4, %s259
      %p261 = scmp.lt.s32.totalorder %s21, 1
      %s262 = scalar_select %p261, %s21, 1
      %s263 = smul.addr %s262, 16
      %s264 = smul.addr %s263, 8
      %s265 = scalar_lea.vmem %s5, %s264
      %p267 = scmp.eq.s32.totalorder %s22, 0
      // Predicated region
      $region37: #{_forward.2} parent=35 // pred_check
        %p268 = pneg %p267
      $region38: #{_forward.2} parent=35 // pred_check_branch
        %270 = sbr.rel (%p268) target = $region40
      $region39: #{_forward.2} parent=35 // pred_region
        %vm271 = vcmask 7168
        %272 = vst.msk [vmem:[%s260] sm:$0xff] %vm271, 0.0
        %273 = vst.msk [vmem:[%s260 + $0x8] sm:$0xff] %vm271, 0.0
        %274 = vst.msk [vmem:[%s260 + $0x10] sm:$0xff] %vm271, 0.0
        %275 = vst.msk [vmem:[%s260 + $0x18] sm:$0xff] %vm271, 0.0
        %276 = vst.msk [vmem:[%s260 + $0x20] sm:$0xff] %vm271, 0.0
        %277 = vst.msk [vmem:[%s260 + $0x28] sm:$0xff] %vm271, 0.0
        %278 = vst.msk [vmem:[%s260 + $0x30] sm:$0xff] %vm271, 0.0
        %279 = vst.msk [vmem:[%s260 + $0x38] sm:$0xff] %vm271, 0.0
        %280 = vst.msk [vmem:[%s260 + $0x40] sm:$0xff] %vm271, 0.0
        %281 = vst.msk [vmem:[%s260 + $0x48] sm:$0xff] %vm271, 0.0
        %282 = vst.msk [vmem:[%s260 + $0x50] sm:$0xff] %vm271, 0.0
        %283 = vst.msk [vmem:[%s260 + $0x58] sm:$0xff] %vm271, 0.0
        %284 = vst.msk [vmem:[%s260 + $0x60] sm:$0xff] %vm271, 0.0
        %285 = vst.msk [vmem:[%s260 + $0x68] sm:$0xff] %vm271, 0.0
        %286 = vst.msk [vmem:[%s260 + $0x70] sm:$0xff] %vm271, 0.0
        %287 = vst.msk [vmem:[%s260 + $0x78] sm:$0xff] %vm271, 0.0
        %288 = vst.msk [vmem:[%s265] sm:$0xff] %vm271, 0.0
        %289 = vst.msk [vmem:[%s265 + $0x8] sm:$0xff] %vm271, 0.0
        %290 = vst.msk [vmem:[%s265 + $0x10] sm:$0xff] %vm271, 0.0
        %291 = vst.msk [vmem:[%s265 + $0x18] sm:$0xff] %vm271, 0.0
        %292 = vst.msk [vmem:[%s265 + $0x20] sm:$0xff] %vm271, 0.0
        %293 = vst.msk [vmem:[%s265 + $0x28] sm:$0xff] %vm271, 0.0
        %294 = vst.msk [vmem:[%s265 + $0x30] sm:$0xff] %vm271, 0.0
        %295 = vst.msk [vmem:[%s265 + $0x38] sm:$0xff] %vm271, 0.0
        %296 = vst.msk [vmem:[%s265 + $0x40] sm:$0xff] %vm271, 0.0
        %297 = vst.msk [vmem:[%s265 + $0x48] sm:$0xff] %vm271, 0.0
        %298 = vst.msk [vmem:[%s265 + $0x50] sm:$0xff] %vm271, 0.0
        %299 = vst.msk [vmem:[%s265 + $0x58] sm:$0xff] %vm271, 0.0
        %300 = vst.msk [vmem:[%s265 + $0x60] sm:$0xff] %vm271, 0.0
        %301 = vst.msk [vmem:[%s265 + $0x68] sm:$0xff] %vm271, 0.0
        %302 = vst.msk [vmem:[%s265 + $0x70] sm:$0xff] %vm271, 0.0
        %303 = vst.msk [vmem:[%s265 + $0x78] sm:$0xff] %vm271, 0.0
      $region40: #{_forward.2} parent=35 // pred_fallthru
        _
      %v304 = vld [vmem:[%s254] sm:$0xf]
      %v305 = vld [vmem:[%s1] sm:$0xf]
      %v306 = vld [vmem:[%s1 + $0x4] sm:$0xf]
      %v307 = vld [vmem:[%s1 + $0x8] sm:$0xf]
      %v308 = vld [vmem:[%s1 + $0xc] sm:$0xf]
      %v309 = vld [vmem:[%s1 + $0x10] sm:$0xf]
      %v310 = vld [vmem:[%s1 + $0x14] sm:$0xf]
      %v311 = vld [vmem:[%s1 + $0x18] sm:$0xf]
      %v312 = vld [vmem:[%s1 + $0x1c] sm:$0xf]
      %v313 = vld [vmem:[%s2] sm:$0xff]
      %v314 = vld [vmem:[%s2 + $0x8] sm:$0xff]
      %v315 = vld [vmem:[%s2 + $0x10] sm:$0xff]
      %v316 = vld [vmem:[%s2 + $0x18] sm:$0xff]
      %v317 = vld [vmem:[%s2 + $0x20] sm:$0xff]
      %v318 = vld [vmem:[%s2 + $0x28] sm:$0xff]
      %v319 = vld [vmem:[%s2 + $0x30] sm:$0xff]
      %v320 = vld [vmem:[%s2 + $0x38] sm:$0xff]
      %322 = vset.pattern.permute.xlu0 0
      %323 = vperm.xlu0 %322, %v313
      %v324 = vpop.permute.xlu0 %323
      %327 = vset.pattern.permute.xlu0 0
      %328 = vperm.xlu0 %327, %v314
      %v329 = vpop.permute.xlu0 %328
      %332 = vset.pattern.permute.xlu0 0
      %333 = vperm.xlu0 %332, %v315
      %v334 = vpop.permute.xlu0 %333
      %337 = vset.pattern.permute.xlu0 0
      %338 = vperm.xlu0 %337, %v316
      %v339 = vpop.permute.xlu0 %338
      %342 = vset.pattern.permute.xlu0 0
      %343 = vperm.xlu0 %342, %v317
      %v344 = vpop.permute.xlu0 %343
      %347 = vset.pattern.permute.xlu0 0
      %348 = vperm.xlu0 %347, %v318
      %v349 = vpop.permute.xlu0 %348
      %352 = vset.pattern.permute.xlu0 0
      %353 = vperm.xlu0 %352, %v319
      %v354 = vpop.permute.xlu0 %353
      %357 = vset.pattern.permute.xlu0 0
      %358 = vperm.xlu0 %357, %v320
      %v359 = vpop.permute.xlu0 %358
      %v369 = vunpack.c.l.b16 %v305
      %v370 = vunpack.c.l.b16 %v306
      %v371 = vunpack.c.l.b16 %v307
      %v372 = vunpack.c.l.b16 %v308
      %v373 = vunpack.c.l.b16 %v309
      %v374 = vunpack.c.l.b16 %v310
      %v375 = vunpack.c.l.b16 %v311
      %v376 = vunpack.c.l.b16 %v312
      %v377 = vpack.c.b16 %v370, %v369
      %v378 = vpack.c.b16 %v372, %v371
      %v379 = vpack.c.b16 %v374, %v373
      %v380 = vpack.c.b16 %v376, %v375
      %v383 = vunpack.c.l.s4 1983009808
      %v384 = vunpack.c.0.s8 %v383
      %v385 = vlaneseq
      %v386 = vshrl.u32 %v385, 7
      %v387 = vsub.s32 %v384, %v386
      %v388 = vrot.slane %v304, %v387
      %v389 = vcombine.high %v388, %v388
      %vm390 = vcmask 31744
      %v392 = vsel %vm390, %v377, 0
      %v395 = vsel %vm390, %v378, 0
      %v398 = vsel %vm390, %v379, 0
      %v401 = vsel %vm390, %v380, 0
      %vm403 = vcmask 1041408
      %v405 = vsel %vm403, %v388, 0
      %v408 = vsel %vm403, %v389, 0
      %410 = vmatprep.subr.bf16.mxu0 %v408
      %411 = vmatpush1.bf16.msra.mxu0 %v405
      %412 = vmatprep.subr.bf16.mxu0 0
      %413 = vmatpush1.bf16.msra.mxu0 0
      %414 = vmatprep.subr.bf16.mxu0 0
      %415 = vmatpush1.bf16.msra.mxu0 0
      %416 = vmatprep.subr.bf16.mxu0 0
      %417 = vmatpush1.bf16.msra.mxu0 0
      %418 = vmatprep.subr.bf16.mxu0 0
      %419 = vmatpush1.bf16.msra.mxu0 0
      %420 = vmatprep.subr.bf16.mxu0 0
      %421 = vmatpush1.bf16.msra.mxu0 0
      %422 = vmatprep.subr.bf16.mxu0 0
      %423 = vmatpush1.bf16.msra.mxu0 0
      %424 = vmatprep.subr.bf16.mxu0 0
      %425 = vmatpush1.bf16.msra.mxu0 0
      %426 = vmatprep.subr.bf16.mxu0 0
      %427 = vmatpush1.bf16.msra.mxu0 0
      %428 = vmatprep.subr.bf16.mxu0 0
      %429 = vmatpush1.bf16.msra.mxu0 0
      %430 = vmatprep.subr.bf16.mxu0 0
      %431 = vmatpush1.bf16.msra.mxu0 0
      %432 = vmatprep.subr.bf16.mxu0 0
      %433 = vmatpush1.bf16.msra.mxu0 0
      %434 = vmatprep.subr.bf16.mxu0 0
      %435 = vmatpush1.bf16.msra.mxu0 0
      %436 = vmatprep.subr.bf16.mxu0 0
      %437 = vmatpush1.bf16.msra.mxu0 0
      %438 = vmatprep.subr.bf16.mxu0 0
      %439 = vmatpush1.bf16.msra.mxu0 0
      %440 = vmatprep.subr.bf16.mxu0 0
      %441 = vmatpush1.bf16.msra.mxu0 0
      %442 = vmatprep.mubr.bf16.mxu0 0
      %443 = vmatmul.mubr.bf16.gmra.mrb[0].mxu0 %v392
      %v444 = vpop.f32.mrb[0].mxu0
      %v445 = vadd.f32 %v324, %v444
      %v446 = vpop.f32.mrb[0].mxu0
      %v447 = vadd.f32 %v324, %v446
      %v448 = vpop.f32.mrb[0].mxu0
      %v449 = vadd.f32 %v329, %v448
      %v450 = vpop.f32.mrb[0].mxu0
      %v451 = vadd.f32 %v329, %v450
      %452 = vmatprep.mubr.bf16.mxu0 0
      %453 = vmatmul.mubr.bf16.gmra.mrb[0].mxu0 %v395
      %v454 = vpop.f32.mrb[0].mxu0
      %v455 = vadd.f32 %v334, %v454
      %v456 = vpop.f32.mrb[0].mxu0
      %v457 = vadd.f32 %v334, %v456
      %v458 = vpop.f32.mrb[0].mxu0
      %v459 = vadd.f32 %v339, %v458
      %v460 = vpop.f32.mrb[0].mxu0
      %v461 = vadd.f32 %v339, %v460
      %462 = vmatprep.mubr.bf16.mxu0 0
      %463 = vmatmul.mubr.bf16.gmra.mrb[0].mxu0 %v398
      %v464 = vpop.f32.mrb[0].mxu0
      %v465 = vadd.f32 %v344, %v464
      %v466 = vpop.f32.mrb[0].mxu0
      %v467 = vadd.f32 %v344, %v466
      %v468 = vpop.f32.mrb[0].mxu0
      %v469 = vadd.f32 %v349, %v468
      %v470 = vpop.f32.mrb[0].mxu0
      %v471 = vadd.f32 %v349, %v470
      %472 = vmatprep.mubr.bf16.mxu0 0
      %473 = vmatmul.mubr.bf16.gmra.mrb[0].mxu0 %v401
      %v474 = vpop.f32.mrb[0].mxu0
      %v475 = vadd.f32 %v354, %v474
      %v476 = vpop.f32.mrb[0].mxu0
      %v477 = vadd.f32 %v354, %v476
      %v478 = vpop.f32.mrb[0].mxu0
      %v479 = vadd.f32 %v359, %v478
      %v480 = vpop.f32.mrb[0].mxu0
      %v481 = vadd.f32 %v359, %v480
      %482 = vdwg.mxu0
      %v483 = vmul.f32 %v445, 0.2
      %v484 = vmul.f32 %v447, 0.2
      %v485 = vmul.f32 %v449, 0.2
      %v486 = vmul.f32 %v451, 0.2
      %v487 = vmul.f32 %v455, 0.2
      %v488 = vmul.f32 %v457, 0.2
      %v489 = vmul.f32 %v459, 0.2
      %v490 = vmul.f32 %v461, 0.2
      %v491 = vmul.f32 %v465, 0.2
      %v492 = vmul.f32 %v467, 0.2
      %v493 = vmul.f32 %v469, 0.2
      %v494 = vmul.f32 %v471, 0.2
      %v495 = vmul.f32 %v475, 0.2
      %v496 = vmul.f32 %v477, 0.2
      %v497 = vmul.f32 %v479, 0.2
      %v498 = vmul.f32 %v481, 0.2
      %v499 = vmax.f32 %v445, %v483
      %v500 = vmax.f32 %v447, %v484
      %v501 = vmax.f32 %v449, %v485
      %v502 = vmax.f32 %v451, %v486
      %v503 = vmax.f32 %v455, %v487
      %v504 = vmax.f32 %v457, %v488
      %v505 = vmax.f32 %v459, %v489
      %v506 = vmax.f32 %v461, %v490
      %v507 = vmax.f32 %v465, %v491
      %v508 = vmax.f32 %v467, %v492
      %v509 = vmax.f32 %v469, %v493
      %v510 = vmax.f32 %v471, %v494
      %v511 = vmax.f32 %v475, %v495
      %v512 = vmax.f32 %v477, %v496
      %v513 = vmax.f32 %v479, %v497
      %v514 = vmax.f32 %v481, %v498
      %v515 = vld [vmem:[%s3] sm:$0xf]
      %v516 = vld [vmem:[%s3 + $0x4] sm:$0xf]
      %v517 = vld [vmem:[%s3 + $0x8] sm:$0xf]
      %v518 = vld [vmem:[%s3 + $0xc] sm:$0xf]
      %v519 = vld [vmem:[%s3 + $0x10] sm:$0xf]
      %v520 = vld [vmem:[%s3 + $0x14] sm:$0xf]
      %v521 = vld [vmem:[%s3 + $0x18] sm:$0xf]
      %v522 = vld [vmem:[%s3 + $0x1c] sm:$0xf]
      %v523 = vld [vmem:[%s3 + $0x20] sm:$0xf]
      %v524 = vld [vmem:[%s3 + $0x24] sm:$0xf]
      %v525 = vld [vmem:[%s3 + $0x28] sm:$0xf]
      %v526 = vld [vmem:[%s3 + $0x2c] sm:$0xf]
      %v527 = vld [vmem:[%s3 + $0x30] sm:$0xf]
      %v528 = vld [vmem:[%s3 + $0x34] sm:$0xf]
      %v529 = vld [vmem:[%s3 + $0x38] sm:$0xf]
      %v530 = vld [vmem:[%s3 + $0x3c] sm:$0xf]
      %v531 = vpack.c.bf16 %v501, %v499
      %v532 = vpack.c.bf16 %v502, %v500
      %v533 = vpack.c.bf16 %v505, %v503
      %v534 = vpack.c.bf16 %v506, %v504
      %v535 = vpack.c.bf16 %v509, %v507
      %v536 = vpack.c.bf16 %v510, %v508
      %v537 = vpack.c.bf16 %v513, %v511
      %v538 = vpack.c.bf16 %v514, %v512
      %v555 = vunpack.c.l.b16 %v515
      %v556 = vunpack.c.l.b16 %v516
      %v557 = vunpack.c.l.b16 %v517
      %v558 = vunpack.c.l.b16 %v518
      %v559 = vunpack.c.l.b16 %v519
      %v560 = vunpack.c.l.b16 %v520
      %v561 = vunpack.c.l.b16 %v521
      %v562 = vunpack.c.l.b16 %v522
      %v563 = vunpack.c.l.b16 %v523
      %v564 = vunpack.c.l.b16 %v524
      %v565 = vunpack.c.l.b16 %v525
      %v566 = vunpack.c.l.b16 %v526
      %v567 = vunpack.c.l.b16 %v527
      %v568 = vunpack.c.l.b16 %v528
      %v569 = vunpack.c.l.b16 %v529
      %v570 = vunpack.c.l.b16 %v530
      %v571 = vpack.c.b16 %v556, %v555
      %v572 = vpack.c.b16 %v558, %v557
      %v573 = vpack.c.b16 %v560, %v559
      %v574 = vpack.c.b16 %v562, %v561
      %v575 = vpack.c.b16 %v564, %v563
      %v576 = vpack.c.b16 %v566, %v565
      %v577 = vpack.c.b16 %v568, %v567
      %v578 = vpack.c.b16 %v570, %v569
      %vm579 = vcmask 523264
      %v581 = vsel %vm579, %v571, 0
      %v584 = vsel %vm579, %v572, 0
      %v587 = vsel %vm579, %v573, 0
      %v590 = vsel %vm579, %v574, 0
      %v593 = vsel %vm579, %v575, 0
      %v596 = vsel %vm579, %v576, 0
      %v599 = vsel %vm579, %v577, 0
      %v602 = vsel %vm579, %v578, 0
      %604 = vmatprep.subr.bf16.mxu0 %v532
      %605 = vmatpush1.bf16.msra.mxu0 %v531
      %606 = vmatprep.subr.bf16.mxu0 %v534
      %607 = vmatpush1.bf16.msra.mxu0 %v533
      %608 = vmatprep.subr.bf16.mxu0 %v536
      %609 = vmatpush1.bf16.msra.mxu0 %v535
      %610 = vmatprep.subr.bf16.mxu0 %v538
      %611 = vmatpush1.bf16.msra.mxu0 %v537
      %612 = vmatprep.subr.bf16.mxu0 0
      %613 = vmatpush1.bf16.msra.mxu0 0
      %614 = vmatprep.subr.bf16.mxu0 0
      %615 = vmatpush1.bf16.msra.mxu0 0
      %616 = vmatprep.subr.bf16.mxu0 0
      %617 = vmatpush1.bf16.msra.mxu0 0
      %618 = vmatprep.subr.bf16.mxu0 0
      %619 = vmatpush1.bf16.msra.mxu0 0
      %620 = vmatprep.subr.bf16.mxu0 0
      %621 = vmatpush1.bf16.msra.mxu0 0
      %622 = vmatprep.subr.bf16.mxu0 0
      %623 = vmatpush1.bf16.msra.mxu0 0
      %624 = vmatprep.subr.bf16.mxu0 0
      %625 = vmatpush1.bf16.msra.mxu0 0
      %626 = vmatprep.subr.bf16.mxu0 0
      %627 = vmatpush1.bf16.msra.mxu0 0
      %628 = vmatprep.subr.bf16.mxu0 0
      %629 = vmatpush1.bf16.msra.mxu0 0
      %630 = vmatprep.subr.bf16.mxu0 0
      %631 = vmatpush1.bf16.msra.mxu0 0
      %632 = vmatprep.subr.bf16.mxu0 0
      %633 = vmatpush1.bf16.msra.mxu0 0
      %634 = vmatprep.subr.bf16.mxu0 0
      %635 = vmatpush1.bf16.msra.mxu0 0
      %636 = vmatprep.mubr.bf16.mxu0 0
      %637 = vmatmul.mubr.bf16.gmra.mrb[0].mxu0 %v581
      %v638 = vpop.f32.mrb[0].mxu0
      %v639 = vadd.f32 0.0, %v638
      %v640 = vpop.f32.mrb[0].mxu0
      %v641 = vadd.f32 0.0, %v640
      %v642 = vpop.f32.mrb[0].mxu0
      %v643 = vadd.f32 0.0, %v642
      %v644 = vpop.f32.mrb[0].mxu0
      %v645 = vadd.f32 0.0, %v644
      %646 = vmatprep.mubr.bf16.mxu0 0
      %647 = vmatmul.mubr.bf16.gmra.mrb[0].mxu0 %v584
      %v648 = vpop.f32.mrb[0].mxu0
      %v649 = vadd.f32 0.0, %v648
      %v650 = vpop.f32.mrb[0].mxu0
      %v651 = vadd.f32 0.0, %v650
      %v652 = vpop.f32.mrb[0].mxu0
      %v653 = vadd.f32 0.0, %v652
      %v654 = vpop.f32.mrb[0].mxu0
      %v655 = vadd.f32 0.0, %v654
      %656 = vmatprep.mubr.bf16.mxu0 0
      %657 = vmatmul.mubr.bf16.gmra.mrb[0].mxu0 %v587
      %v658 = vpop.f32.mrb[0].mxu0
      %v659 = vadd.f32 0.0, %v658
      %v660 = vpop.f32.mrb[0].mxu0
      %v661 = vadd.f32 0.0, %v660
      %v662 = vpop.f32.mrb[0].mxu0
      %v663 = vadd.f32 0.0, %v662
      %v664 = vpop.f32.mrb[0].mxu0
      %v665 = vadd.f32 0.0, %v664
      %666 = vmatprep.mubr.bf16.mxu0 0
      %667 = vmatmul.mubr.bf16.gmra.mrb[0].mxu0 %v590
      %v668 = vpop.f32.mrb[0].mxu0
      %v669 = vadd.f32 0.0, %v668
      %v670 = vpop.f32.mrb[0].mxu0
      %v671 = vadd.f32 0.0, %v670
      %v672 = vpop.f32.mrb[0].mxu0
      %v673 = vadd.f32 0.0, %v672
      %v674 = vpop.f32.mrb[0].mxu0
      %v675 = vadd.f32 0.0, %v674
      %676 = vmatprep.mubr.bf16.mxu0 0
      %677 = vmatmul.mubr.bf16.gmra.mrb[0].mxu0 %v593
      %v678 = vpop.f32.mrb[0].mxu0
      %v679 = vadd.f32 0.0, %v678
      %v680 = vpop.f32.mrb[0].mxu0
      %v681 = vadd.f32 0.0, %v680
      %v682 = vpop.f32.mrb[0].mxu0
      %v683 = vadd.f32 0.0, %v682
      %v684 = vpop.f32.mrb[0].mxu0
      %v685 = vadd.f32 0.0, %v684
      %686 = vmatprep.mubr.bf16.mxu0 0
      %687 = vmatmul.mubr.bf16.gmra.mrb[0].mxu0 %v596
      %v688 = vpop.f32.mrb[0].mxu0
      %v689 = vadd.f32 0.0, %v688
      %v690 = vpop.f32.mrb[0].mxu0
      %v691 = vadd.f32 0.0, %v690
      %v692 = vpop.f32.mrb[0].mxu0
      %v693 = vadd.f32 0.0, %v692
      %v694 = vpop.f32.mrb[0].mxu0
      %v695 = vadd.f32 0.0, %v694
      %696 = vmatprep.mubr.bf16.mxu0 0
      %697 = vmatmul.mubr.bf16.gmra.mrb[0].mxu0 %v599
      %v698 = vpop.f32.mrb[0].mxu0
      %v699 = vadd.f32 0.0, %v698
      %v700 = vpop.f32.mrb[0].mxu0
      %v701 = vadd.f32 0.0, %v700
      %v702 = vpop.f32.mrb[0].mxu0
      %v703 = vadd.f32 0.0, %v702
      %v704 = vpop.f32.mrb[0].mxu0
      %v705 = vadd.f32 0.0, %v704
      %706 = vmatprep.mubr.bf16.mxu0 0
      %707 = vmatmul.mubr.bf16.gmra.mrb[0].mxu0 %v602
      %v708 = vpop.f32.mrb[0].mxu0
      %v709 = vadd.f32 0.0, %v708
      %v710 = vpop.f32.mrb[0].mxu0
      %v711 = vadd.f32 0.0, %v710
      %v712 = vpop.f32.mrb[0].mxu0
      %v713 = vadd.f32 0.0, %v712
      %v714 = vpop.f32.mrb[0].mxu0
      %v715 = vadd.f32 0.0, %v714
      %716 = vdwg.mxu0
      %v717 = vld [vmem:[%s260] sm:$0xff]
      %v718 = vld [vmem:[%s260 + $0x8] sm:$0xff]
      %v719 = vld [vmem:[%s260 + $0x10] sm:$0xff]
      %v720 = vld [vmem:[%s260 + $0x18] sm:$0xff]
      %v721 = vld [vmem:[%s260 + $0x20] sm:$0xff]
      %v722 = vld [vmem:[%s260 + $0x28] sm:$0xff]
      %v723 = vld [vmem:[%s260 + $0x30] sm:$0xff]
      %v724 = vld [vmem:[%s260 + $0x38] sm:$0xff]
      %v725 = vld [vmem:[%s260 + $0x40] sm:$0xff]
      %v726 = vld [vmem:[%s260 + $0x48] sm:$0xff]
      %v727 = vld [vmem:[%s260 + $0x50] sm:$0xff]
      %v728 = vld [vmem:[%s260 + $0x58] sm:$0xff]
      %v729 = vld [vmem:[%s260 + $0x60] sm:$0xff]
      %v730 = vld [vmem:[%s260 + $0x68] sm:$0xff]
      %v731 = vld [vmem:[%s260 + $0x70] sm:$0xff]
      %v732 = vld [vmem:[%s260 + $0x78] sm:$0xff]
      %v733 = vadd.f32 %v639, %v641
      %734 = vadd.xlane.f32.xlu0 %v733
      %v735 = vpop.xlane.xlu0 %734
      %v736 = vadd.f32 %v643, %v645
      %737 = vadd.xlane.f32.xlu0 %v736
      %v738 = vpop.xlane.xlu0 %737
      %v739 = vadd.f32 %v649, %v651
      %740 = vadd.xlane.f32.xlu0 %v739
      %v741 = vpop.xlane.xlu0 %740
      %v742 = vadd.f32 %v653, %v655
      %743 = vadd.xlane.f32.xlu0 %v742
      %v744 = vpop.xlane.xlu0 %743
      %v745 = vadd.f32 %v659, %v661
      %746 = vadd.xlane.f32.xlu0 %v745
      %v747 = vpop.xlane.xlu0 %746
      %v748 = vadd.f32 %v663, %v665
      %749 = vadd.xlane.f32.xlu0 %v748
      %v750 = vpop.xlane.xlu0 %749
      %v751 = vadd.f32 %v669, %v671
      %752 = vadd.xlane.f32.xlu0 %v751
      %v753 = vpop.xlane.xlu0 %752
      %v754 = vadd.f32 %v673, %v675
      %755 = vadd.xlane.f32.xlu0 %v754
      %v756 = vpop.xlane.xlu0 %755
      %v757 = vadd.f32 %v679, %v681
      %758 = vadd.xlane.f32.xlu0 %v757
      %v759 = vpop.xlane.xlu0 %758
      %v760 = vadd.f32 %v683, %v685
      %761 = vadd.xlane.f32.xlu0 %v760
      %v762 = vpop.xlane.xlu0 %761
      %v763 = vadd.f32 %v689, %v691
      %764 = vadd.xlane.f32.xlu0 %v763
      %v765 = vpop.xlane.xlu0 %764
      %v766 = vadd.f32 %v693, %v695
      %767 = vadd.xlane.f32.xlu0 %v766
      %v768 = vpop.xlane.xlu0 %767
      %v769 = vadd.f32 %v699, %v701
      %770 = vadd.xlane.f32.xlu0 %v769
      %v771 = vpop.xlane.xlu0 %770
      %v772 = vadd.f32 %v703, %v705
      %773 = vadd.xlane.f32.xlu0 %v772
      %v774 = vpop.xlane.xlu0 %773
      %v775 = vadd.f32 %v709, %v711
      %776 = vadd.xlane.f32.xlu0 %v775
      %v777 = vpop.xlane.xlu0 %776
      %v778 = vadd.f32 %v713, %v715
      %779 = vadd.xlane.f32.xlu0 %v778
      %v780 = vpop.xlane.xlu0 %779
      %v781 = vadd.f32 %v717, %v735
      %v782 = vadd.f32 %v718, %v738
      %v783 = vadd.f32 %v719, %v741
      %v784 = vadd.f32 %v720, %v744
      %v785 = vadd.f32 %v721, %v747
      %v786 = vadd.f32 %v722, %v750
      %v787 = vadd.f32 %v723, %v753
      %v788 = vadd.f32 %v724, %v756
      %v789 = vadd.f32 %v725, %v759
      %v790 = vadd.f32 %v726, %v762
      %v791 = vadd.f32 %v727, %v765
      %v792 = vadd.f32 %v728, %v768
      %v793 = vadd.f32 %v729, %v771
      %v794 = vadd.f32 %v730, %v774
      %v795 = vadd.f32 %v731, %v777
      %v796 = vadd.f32 %v732, %v780
      %vm797 = vcmask 7168
      %798 = vst.msk [vmem:[%s260] sm:$0xff] %vm797, %v781
      %799 = vst.msk [vmem:[%s260 + $0x8] sm:$0xff] %vm797, %v782
      %800 = vst.msk [vmem:[%s260 + $0x10] sm:$0xff] %vm797, %v783
      %801 = vst.msk [vmem:[%s260 + $0x18] sm:$0xff] %vm797, %v784
      %802 = vst.msk [vmem:[%s260 + $0x20] sm:$0xff] %vm797, %v785
      %803 = vst.msk [vmem:[%s260 + $0x28] sm:$0xff] %vm797, %v786
      %804 = vst.msk [vmem:[%s260 + $0x30] sm:$0xff] %vm797, %v787
      %805 = vst.msk [vmem:[%s260 + $0x38] sm:$0xff] %vm797, %v788
      %806 = vst.msk [vmem:[%s260 + $0x40] sm:$0xff] %vm797, %v789
      %807 = vst.msk [vmem:[%s260 + $0x48] sm:$0xff] %vm797, %v790
      %808 = vst.msk [vmem:[%s260 + $0x50] sm:$0xff] %vm797, %v791
      %809 = vst.msk [vmem:[%s260 + $0x58] sm:$0xff] %vm797, %v792
      %810 = vst.msk [vmem:[%s260 + $0x60] sm:$0xff] %vm797, %v793
      %811 = vst.msk [vmem:[%s260 + $0x68] sm:$0xff] %vm797, %v794
      %812 = vst.msk [vmem:[%s260 + $0x70] sm:$0xff] %vm797, %v795
      %813 = vst.msk [vmem:[%s260 + $0x78] sm:$0xff] %vm797, %v796
      %v814 = vld [vmem:[%s265] sm:$0xff]
      %v815 = vld [vmem:[%s265 + $0x8] sm:$0xff]
      %v816 = vld [vmem:[%s265 + $0x10] sm:$0xff]
      %v817 = vld [vmem:[%s265 + $0x18] sm:$0xff]
      %v818 = vld [vmem:[%s265 + $0x20] sm:$0xff]
      %v819 = vld [vmem:[%s265 + $0x28] sm:$0xff]
      %v820 = vld [vmem:[%s265 + $0x30] sm:$0xff]
      %v821 = vld [vmem:[%s265 + $0x38] sm:$0xff]
      %v822 = vld [vmem:[%s265 + $0x40] sm:$0xff]
      %v823 = vld [vmem:[%s265 + $0x48] sm:$0xff]
      %v824 = vld [vmem:[%s265 + $0x50] sm:$0xff]
      %v825 = vld [vmem:[%s265 + $0x58] sm:$0xff]
      %v826 = vld [vmem:[%s265 + $0x60] sm:$0xff]
      %v827 = vld [vmem:[%s265 + $0x68] sm:$0xff]
      %v828 = vld [vmem:[%s265 + $0x70] sm:$0xff]
      %v829 = vld [vmem:[%s265 + $0x78] sm:$0xff]
      %v830 = vmul.f32 %v639, %v639
      %v831 = vmul.f32 %v641, %v641
      %v832 = vmul.f32 %v643, %v643
      %v833 = vmul.f32 %v645, %v645
      %v834 = vmul.f32 %v649, %v649
      %v835 = vmul.f32 %v651, %v651
      %v836 = vmul.f32 %v653, %v653
      %v837 = vmul.f32 %v655, %v655
      %v838 = vmul.f32 %v659, %v659
      %v839 = vmul.f32 %v661, %v661
      %v840 = vmul.f32 %v663, %v663
      %v841 = vmul.f32 %v665, %v665
      %v842 = vmul.f32 %v669, %v669
      %v843 = vmul.f32 %v671, %v671
      %v844 = vmul.f32 %v673, %v673
      %v845 = vmul.f32 %v675, %v675
      %v846 = vmul.f32 %v679, %v679
      %v847 = vmul.f32 %v681, %v681
      %v848 = vmul.f32 %v683, %v683
      %v849 = vmul.f32 %v685, %v685
      %v850 = vmul.f32 %v689, %v689
      %v851 = vmul.f32 %v691, %v691
      %v852 = vmul.f32 %v693, %v693
      %v853 = vmul.f32 %v695, %v695
      %v854 = vmul.f32 %v699, %v699
      %v855 = vmul.f32 %v701, %v701
      %v856 = vmul.f32 %v703, %v703
      %v857 = vmul.f32 %v705, %v705
      %v858 = vmul.f32 %v709, %v709
      %v859 = vmul.f32 %v711, %v711
      %v860 = vmul.f32 %v713, %v713
      %v861 = vmul.f32 %v715, %v715
      %v862 = vadd.f32 %v830, %v831
      %863 = vadd.xlane.f32.xlu0 %v862
      %v864 = vpop.xlane.xlu0 %863
      %v865 = vadd.f32 %v832, %v833
      %866 = vadd.xlane.f32.xlu0 %v865
      %v867 = vpop.xlane.xlu0 %866
      %v868 = vadd.f32 %v834, %v835
      %869 = vadd.xlane.f32.xlu0 %v868
      %v870 = vpop.xlane.xlu0 %869
      %v871 = vadd.f32 %v836, %v837
      %872 = vadd.xlane.f32.xlu0 %v871
      %v873 = vpop.xlane.xlu0 %872
      %v874 = vadd.f32 %v838, %v839
      %875 = vadd.xlane.f32.xlu0 %v874
      %v876 = vpop.xlane.xlu0 %875
      %v877 = vadd.f32 %v840, %v841
      %878 = vadd.xlane.f32.xlu0 %v877
      %v879 = vpop.xlane.xlu0 %878
      %v880 = vadd.f32 %v842, %v843
      %881 = vadd.xlane.f32.xlu0 %v880
      %v882 = vpop.xlane.xlu0 %881
      %v883 = vadd.f32 %v844, %v845
      %884 = vadd.xlane.f32.xlu0 %v883
      %v885 = vpop.xlane.xlu0 %884
      %v886 = vadd.f32 %v846, %v847
      %887 = vadd.xlane.f32.xlu0 %v886
      %v888 = vpop.xlane.xlu0 %887
      %v889 = vadd.f32 %v848, %v849
      %890 = vadd.xlane.f32.xlu0 %v889
      %v891 = vpop.xlane.xlu0 %890
      %v892 = vadd.f32 %v850, %v851
      %893 = vadd.xlane.f32.xlu0 %v892
      %v894 = vpop.xlane.xlu0 %893
      %v895 = vadd.f32 %v852, %v853
      %896 = vadd.xlane.f32.xlu0 %v895
      %v897 = vpop.xlane.xlu0 %896
      %v898 = vadd.f32 %v854, %v855
      %899 = vadd.xlane.f32.xlu0 %v898
      %v900 = vpop.xlane.xlu0 %899
      %v901 = vadd.f32 %v856, %v857
      %902 = vadd.xlane.f32.xlu0 %v901
      %v903 = vpop.xlane.xlu0 %902
      %v904 = vadd.f32 %v858, %v859
      %905 = vadd.xlane.f32.xlu0 %v904
      %v906 = vpop.xlane.xlu0 %905
      %v907 = vadd.f32 %v860, %v861
      %908 = vadd.xlane.f32.xlu0 %v907
      %v909 = vpop.xlane.xlu0 %908
      %v910 = vadd.f32 %v814, %v864
      %v911 = vadd.f32 %v815, %v867
      %v912 = vadd.f32 %v816, %v870
      %v913 = vadd.f32 %v817, %v873
      %v914 = vadd.f32 %v818, %v876
      %v915 = vadd.f32 %v819, %v879
      %v916 = vadd.f32 %v820, %v882
      %v917 = vadd.f32 %v821, %v885
      %v918 = vadd.f32 %v822, %v888
      %v919 = vadd.f32 %v823, %v891
      %v920 = vadd.f32 %v824, %v894
      %v921 = vadd.f32 %v825, %v897
      %v922 = vadd.f32 %v826, %v900
      %v923 = vadd.f32 %v827, %v903
      %v924 = vadd.f32 %v828, %v906
      %v925 = vadd.f32 %v829, %v909
      %926 = vst.msk [vmem:[%s265] sm:$0xff] %vm797, %v910
      %927 = vst.msk [vmem:[%s265 + $0x8] sm:$0xff] %vm797, %v911
      %928 = vst.msk [vmem:[%s265 + $0x10] sm:$0xff] %vm797, %v912
      %929 = vst.msk [vmem:[%s265 + $0x18] sm:$0xff] %vm797, %v913
      %930 = vst.msk [vmem:[%s265 + $0x20] sm:$0xff] %vm797, %v914
      %931 = vst.msk [vmem:[%s265 + $0x28] sm:$0xff] %vm797, %v915
      %932 = vst.msk [vmem:[%s265 + $0x30] sm:$0xff] %vm797, %v916
      %933 = vst.msk [vmem:[%s265 + $0x38] sm:$0xff] %vm797, %v917
      %934 = vst.msk [vmem:[%s265 + $0x40] sm:$0xff] %vm797, %v918
      %935 = vst.msk [vmem:[%s265 + $0x48] sm:$0xff] %vm797, %v919
      %936 = vst.msk [vmem:[%s265 + $0x50] sm:$0xff] %vm797, %v920
      %937 = vst.msk [vmem:[%s265 + $0x58] sm:$0xff] %vm797, %v921
      %938 = vst.msk [vmem:[%s265 + $0x60] sm:$0xff] %vm797, %v922
      %939 = vst.msk [vmem:[%s265 + $0x68] sm:$0xff] %vm797, %v923
      %940 = vst.msk [vmem:[%s265 + $0x70] sm:$0xff] %vm797, %v924
      %941 = vst.msk [vmem:[%s265 + $0x78] sm:$0xff] %vm797, %v925
      %p942 = scmp.lt.s32.totalorder %s21, 1
      %s943 = scalar_select %p942, %s21, 1
      %s944 = smul.addr %s943, 16
      %s945 = smul.addr %s944, 8
      %s946 = scalar_lea.vmem %s4, %s945
      %p947 = scmp.lt.s32.totalorder %s21, 1
      %s948 = scalar_select %p947, %s21, 1
      %s949 = smul.addr %s948, 16
      %s950 = smul.addr %s949, 8
      %s951 = scalar_lea.vmem %s5, %s950
      // Predicated region
      $region41: #{_forward.2} parent=35 // pred_check
        %p952 = pneg %p138
      $region42: #{_forward.2} parent=35 // pred_check_branch
        %954 = sbr.rel (%p952) target = $region44
      $region43: #{_forward.2} parent=35 // pred_region
        _
      $region44: #{_forward.2} parent=35 // pred_fallthru
        _
      // Predicated region
      $region45: #{_forward.2} parent=35 // pred_check
        %p955 = pneg %p164
      $region46: #{_forward.2} parent=35 // pred_check_branch
        %957 = sbr.rel (%p955) target = $region48
      $region47: #{_forward.2} parent=35 // pred_region
        _
      $region48: #{_forward.2} parent=35 // pred_fallthru
        _
    $region36: #{_forward.2} parent=5 // pred_fallthru
      _
    %p958 = scmp.le.s32.totalorder 2, %s12
    // Predicated region
    $region49: #{_forward.2} parent=5 // pred_check
      %p959 = pneg %p958
    $region50: #{_forward.2} parent=5 // pred_check_branch
      %961 = sbr.rel (%p959) target = $region52
    $region51: #{_forward.2} parent=5 // pred_region
      %s962 = ssub.s32 %s12, 2
      // Predicated region
      $region53: #{_forward.2} parent=51 // pred_check
        %p963 = pneg %p144
      $region54: #{_forward.2} parent=51 // pred_check_branch
        %965 = sbr.rel (%p963) target = $region56
      $region55: #{_forward.2} parent=51 // pred_region
        %p966 = scmp.lt.s32.totalorder %s23, 1
        %s967 = scalar_select %p966, %s23, 1
        %s968 = smul.addr %s967, 16
        %s969 = smul.addr %s968, 8
        %s970 = scalar_lea.vmem %s4, %s969
      $region56: #{_forward.2} parent=51 // pred_fallthru
        _
      // Predicated region
      $region57: #{_forward.2} parent=51 // pred_check
        %p971 = pneg %p170
      $region58: #{_forward.2} parent=51 // pred_check_branch
        %973 = sbr.rel (%p971) target = $region60
      $region59: #{_forward.2} parent=51 // pred_region
        %p974 = scmp.lt.s32.totalorder %s23, 1
        %s975 = scalar_select %p974, %s23, 1
        %s976 = smul.addr %s975, 16
        %s977 = smul.addr %s976, 8
        %s978 = scalar_lea.vmem %s5, %s977
      $region60: #{_forward.2} parent=51 // pred_fallthru
        _
    $region52: #{_forward.2} parent=5 // pred_fallthru
      _
  $region6: #{_forward.2} parent=0 // loop_footer
    %s16 = sadd.s32 1, %s12
  $region7: #{_forward.2} parent=0 // loop_footer_branch
    %11 = sbr.rel target = $region3
  $region8: #{_forward.2} parent=0 // loop_exit
    _

// kernel: _forward.3
$region0: #{_forward.3}
  #allocation0 [shape = 'u32[]', space=smem, size = 0x4, offset = 0x4, fixed_abs, tag = 'smem constant byte address 0x4 - core index']
  #allocation1 [shape = 'u32[144,128]{1,0:T(1,128)}', space=vmem, size = 0x12000, scoped, tag = 'internal scratch']
  %s0 = inlined_call_operand.vmem [shape: bf16[2,4,256], index: 0, kind: input, shape index: {}]
  %s1 = inlined_call_operand.vmem [shape: bf16[64,4], index: 1, kind: input, shape index: {}]
  %s2 = inlined_call_operand.vmem [shape: f32[64,1], index: 2, kind: input, shape index: {}]
  %s3 = inlined_call_operand.vmem [shape: bf16[128,64], index: 3, kind: input, shape index: {}]
  %s4 = inlined_call_operand.vmem [shape: f32[128,1], index: 4, kind: input, shape index: {}]
  %s5 = inlined_call_operand.vmem [shape: f32[128,1], index: 5, kind: input, shape index: {}]
  %s6 = inlined_call_operand.vmem [shape: f32[128,1], index: 6, kind: input, shape index: {}]
  %s7 = inlined_call_operand.vmem [shape: f32[128,1], index: 7, kind: input, shape index: {}]
  %s8 = inlined_call_operand.vmem [shape: bf16[1,128], index: 8, kind: input, shape index: {}]
  %s9 = inlined_call_operand.vmem [shape: f32[2,1,256], index: 9, kind: output, shape index: {}]
  %s10 = sld [smem:[#allocation0]]
  $region69: #{_forward.3} parent=0
    _
  %s12 = ssub.s32 1, %s10
  %s13 = scalar_select 0, %s12, %s10
  loop: start=0, step=1, limit=4
  $region2: #{_forward.3} parent=0 // loop_pre_header
    _
  $region3: #{_forward.3} parent=0 // loop_header
    %s15 = sphi 0, %s19
    %p16 = scmp.ge.s32.totalorder %s15, 4
    %s22 = sphi 0, %s34
    %s23 = sphi 0, %s30
    %s24 = sphi 0, %s22
    %s25 = sphi 0, %s23
    %s26 = sphi 0, %s24
    %s27 = sphi 0, %s25
    %s39 = sphi 0, %s41
    %s42 = sphi 0, %s39
    %s43 = sphi 0, %s42
    %s59 = sphi 0, %s43
    %s63 = sphi 0, %s63
    %s65 = sphi 0, %s63
    %s66 = sphi 0, %s65
    %s80 = sphi 0, %s66
    %s84 = sphi 0, %s84
    %s86 = sphi 0, %s84
    %s87 = sphi 0, %s86
    %s101 = sphi 0, %s87
    %s105 = sphi 0, %s105
    %s107 = sphi 0, %s105
    %s108 = sphi 0, %s107
    %s122 = sphi 0, %s108
    %s126 = sphi 0, %s126
    %s128 = sphi 0, %s126
    %s129 = sphi 0, %s128
    %s143 = sphi 0, %s129
    %s147 = sphi 0, %s147
    %s149 = sphi 0, %s147
    %s150 = sphi 0, %s149
    %s164 = sphi 0, %s150
    %s168 = sphi 0, %s168
    %s170 = sphi 0, %s168
    %s171 = sphi 0, %s170
    %s185 = sphi 0, %s171
    %s189 = sphi 0, %s189
    %s191 = sphi 0, %s189
    %s192 = sphi 0, %s191
    %s206 = sphi 0, %s192
    %s210 = sphi 0, %s210
    %s212 = sphi 0, %s210
    %s213 = sphi 0, %s212
    %s227 = sphi 0, %s213
    %s235 = sphi 0, %s237
    %s238 = sphi 0, %s235
    %s239 = sphi 0, %s238
    %s255 = sphi 0, %s239
  $region4: #{_forward.3} parent=0 // loop_header_branch
    %18 = sbr.rel (%p16) target = $region8
  $region5: #{_forward.3} parent=0 // loop_body
    %s20 = ssub.s32 %s15, 1
    %s21 = ssub.s32 %s15, 2
    %s28 = sadd.s32 1, %s23
    %p29 = scmp.ge.s32.totalorder %s28, 1
    %s30 = scalar_select %p29, 0, %s28
    %s31 = sadd.s32 1, %s22
    %s32 = scalar_select %p29, %s31, %s22
    %p33 = scmp.ge.s32.totalorder %s32, 2
    %s34 = scalar_select %p33, 0, %s32
    %s35 = ssub.s32 %s22, %s34
    %s36 = ssub.s32 %s23, %s30
    %s37 = sor.u32 %s35, %s36
    %p38 = scmp.eq.s32.totalorder %s37, 0
    %s40 = sadd.s32 %s39, 1
    %s41 = scalar_select %p38, %s39, %s40
    %p44 = pneg %p38
    %p45 = scmp.eq.s32.totalorder %s15, 1
    %p46 = por %p44, %p45
    %p47 = scmp.ne.s32.totalorder %s39, %s42
    %p48 = scmp.eq.s32.totalorder %s15, 0
    %p49 = por %p47, %p48
    %p50 = scmp.ne.s32.totalorder %s39, %s42
    %p51 = scmp.eq.s32.totalorder %s20, 1
    %p52 = por %p50, %p51
    %p53 = scmp.ne.s32.totalorder %s42, %s43
    %p54 = scmp.eq.s32.totalorder %s20, 0
    %p55 = por %p53, %p54
    %p56 = scmp.ne.s32.totalorder %s42, %s43
    %p57 = scmp.eq.s32.totalorder %s21, 1
    %p58 = por %p56, %p57
    %p60 = scmp.ne.s32.totalorder %s43, %s59
    %p61 = scmp.eq.s32.totalorder %s21, 0
    %p62 = por %p60, %p61
    %s64 = sadd.s32 %s63, 1
    %p67 = scmp.eq.s32.totalorder %s15, 1
    %p68 = scmp.ne.s32.totalorder %s63, %s65
    %p69 = scmp.eq.s32.totalorder %s15, 0
    %p70 = por %p68, %p69
    %p71 = scmp.ne.s32.totalorder %s63, %s65
    %p72 = scmp.eq.s32.totalorder %s20, 1
    %p73 = por %p71, %p72
    %p74 = scmp.ne.s32.totalorder %s65, %s66
    %p75 = scmp.eq.s32.totalorder %s20, 0
    %p76 = por %p74, %p75
    %p77 = scmp.ne.s32.totalorder %s65, %s66
    %p78 = scmp.eq.s32.totalorder %s21, 1
    %p79 = por %p77, %p78
    %p81 = scmp.ne.s32.totalorder %s66, %s80
    %p82 = scmp.eq.s32.totalorder %s21, 0
    %p83 = por %p81, %p82
    %s85 = sadd.s32 %s84, 1
    %p88 = scmp.eq.s32.totalorder %s15, 1
    %p89 = scmp.ne.s32.totalorder %s84, %s86
    %p90 = scmp.eq.s32.totalorder %s15, 0
    %p91 = por %p89, %p90
    %p92 = scmp.ne.s32.totalorder %s84, %s86
    %p93 = scmp.eq.s32.totalorder %s20, 1
    %p94 = por %p92, %p93
    %p95 = scmp.ne.s32.totalorder %s86, %s87
    %p96 = scmp.eq.s32.totalorder %s20, 0
    %p97 = por %p95, %p96
    %p98 = scmp.ne.s32.totalorder %s86, %s87
    %p99 = scmp.eq.s32.totalorder %s21, 1
    %p100 = por %p98, %p99
    %p102 = scmp.ne.s32.totalorder %s87, %s101
    %p103 = scmp.eq.s32.totalorder %s21, 0
    %p104 = por %p102, %p103
    %s106 = sadd.s32 %s105, 1
    %p109 = scmp.eq.s32.totalorder %s15, 1
    %p110 = scmp.ne.s32.totalorder %s105, %s107
    %p111 = scmp.eq.s32.totalorder %s15, 0
    %p112 = por %p110, %p111
    %p113 = scmp.ne.s32.totalorder %s105, %s107
    %p114 = scmp.eq.s32.totalorder %s20, 1
    %p115 = por %p113, %p114
    %p116 = scmp.ne.s32.totalorder %s107, %s108
    %p117 = scmp.eq.s32.totalorder %s20, 0
    %p118 = por %p116, %p117
    %p119 = scmp.ne.s32.totalorder %s107, %s108
    %p120 = scmp.eq.s32.totalorder %s21, 1
    %p121 = por %p119, %p120
    %p123 = scmp.ne.s32.totalorder %s108, %s122
    %p124 = scmp.eq.s32.totalorder %s21, 0
    %p125 = por %p123, %p124
    %s127 = sadd.s32 %s126, 1
    %p130 = scmp.eq.s32.totalorder %s15, 1
    %p131 = scmp.ne.s32.totalorder %s126, %s128
    %p132 = scmp.eq.s32.totalorder %s15, 0
    %p133 = por %p131, %p132
    %p134 = scmp.ne.s32.totalorder %s126, %s128
    %p135 = scmp.eq.s32.totalorder %s20, 1
    %p136 = por %p134, %p135
    %p137 = scmp.ne.s32.totalorder %s128, %s129
    %p138 = scmp.eq.s32.totalorder %s20, 0
    %p139 = por %p137, %p138
    %p140 = scmp.ne.s32.totalorder %s128, %s129
    %p141 = scmp.eq.s32.totalorder %s21, 1
    %p142 = por %p140, %p141
    %p144 = scmp.ne.s32.totalorder %s129, %s143
    %p145 = scmp.eq.s32.totalorder %s21, 0
    %p146 = por %p144, %p145
    %s148 = sadd.s32 %s147, 1
    %p151 = scmp.eq.s32.totalorder %s15, 1
    %p152 = scmp.ne.s32.totalorder %s147, %s149
    %p153 = scmp.eq.s32.totalorder %s15, 0
    %p154 = por %p152, %p153
    %p155 = scmp.ne.s32.totalorder %s147, %s149
    %p156 = scmp.eq.s32.totalorder %s20, 1
    %p157 = por %p155, %p156
    %p158 = scmp.ne.s32.totalorder %s149, %s150
    %p159 = scmp.eq.s32.totalorder %s20, 0
    %p160 = por %p158, %p159
    %p161 = scmp.ne.s32.totalorder %s149, %s150
    %p162 = scmp.eq.s32.totalorder %s21, 1
    %p163 = por %p161, %p162
    %p165 = scmp.ne.s32.totalorder %s150, %s164
    %p166 = scmp.eq.s32.totalorder %s21, 0
    %p167 = por %p165, %p166
    %s169 = sadd.s32 %s168, 1
    %p172 = scmp.eq.s32.totalorder %s15, 1
    %p173 = scmp.ne.s32.totalorder %s168, %s170
    %p174 = scmp.eq.s32.totalorder %s15, 0
    %p175 = por %p173, %p174
    %p176 = scmp.ne.s32.totalorder %s168, %s170
    %p177 = scmp.eq.s32.totalorder %s20, 1
    %p178 = por %p176, %p177
    %p179 = scmp.ne.s32.totalorder %s170, %s171
    %p180 = scmp.eq.s32.totalorder %s20, 0
    %p181 = por %p179, %p180
    %p182 = scmp.ne.s32.totalorder %s170, %s171
    %p183 = scmp.eq.s32.totalorder %s21, 1
    %p184 = por %p182, %p183
    %p186 = scmp.ne.s32.totalorder %s171, %s185
    %p187 = scmp.eq.s32.totalorder %s21, 0
    %p188 = por %p186, %p187
    %s190 = sadd.s32 %s189, 1
    %p193 = scmp.eq.s32.totalorder %s15, 1
    %p194 = scmp.ne.s32.totalorder %s189, %s191
    %p195 = scmp.eq.s32.totalorder %s15, 0
    %p196 = por %p194, %p195
    %p197 = scmp.ne.s32.totalorder %s189, %s191
    %p198 = scmp.eq.s32.totalorder %s20, 1
    %p199 = por %p197, %p198
    %p200 = scmp.ne.s32.totalorder %s191, %s192
    %p201 = scmp.eq.s32.totalorder %s20, 0
    %p202 = por %p200, %p201
    %p203 = scmp.ne.s32.totalorder %s191, %s192
    %p204 = scmp.eq.s32.totalorder %s21, 1
    %p205 = por %p203, %p204
    %p207 = scmp.ne.s32.totalorder %s192, %s206
    %p208 = scmp.eq.s32.totalorder %s21, 0
    %p209 = por %p207, %p208
    %s211 = sadd.s32 %s210, 1
    %p214 = scmp.eq.s32.totalorder %s15, 1
    %p215 = scmp.ne.s32.totalorder %s210, %s212
    %p216 = scmp.eq.s32.totalorder %s15, 0
    %p217 = por %p215, %p216
    %p218 = scmp.ne.s32.totalorder %s210, %s212
    %p219 = scmp.eq.s32.totalorder %s20, 1
    %p220 = por %p218, %p219
    %p221 = scmp.ne.s32.totalorder %s212, %s213
    %p222 = scmp.eq.s32.totalorder %s20, 0
    %p223 = por %p221, %p222
    %p224 = scmp.ne.s32.totalorder %s212, %s213
    %p225 = scmp.eq.s32.totalorder %s21, 1
    %p226 = por %p224, %p225
    %p228 = scmp.ne.s32.totalorder %s213, %s227
    %p229 = scmp.eq.s32.totalorder %s21, 0
    %p230 = por %p228, %p229
    %s231 = ssub.s32 %s22, %s34
    %s232 = ssub.s32 %s23, %s30
    %s233 = sor.u32 %s231, %s232
    %p234 = scmp.eq.s32.totalorder %s233, 0
    %s236 = sadd.s32 %s235, 1
    %s237 = scalar_select %p234, %s235, %s236
    %p240 = pneg %p234
    %p241 = scmp.eq.s32.totalorder %s15, 1
    %p242 = por %p240, %p241
    %p243 = scmp.ne.s32.totalorder %s235, %s238
    %p244 = scmp.eq.s32.totalorder %s15, 0
    %p245 = por %p243, %p244
    %p246 = scmp.ne.s32.totalorder %s235, %s238
    %p247 = scmp.eq.s32.totalorder %s20, 1
    %p248 = por %p246, %p247
    %p249 = scmp.ne.s32.totalorder %s238, %s239
    %p250 = scmp.eq.s32.totalorder %s20, 0
    %p251 = por %p249, %p250
    %p252 = scmp.ne.s32.totalorder %s238, %s239
    %p253 = scmp.eq.s32.totalorder %s21, 1
    %p254 = por %p252, %p253
    %p256 = scmp.ne.s32.totalorder %s239, %s255
    %p257 = scmp.eq.s32.totalorder %s21, 0
    %p258 = por %p256, %p257
    %p259 = scmp.le.s32.totalorder 1, %s15
    %p260 = scmp.lt.s32.totalorder %s15, 3
    %p261 = pnand %p259, %p260
    %p262 = pneg %p261
    // Predicated region
    $region9: #{_forward.3} parent=5 // pred_check
      _
    $region10: #{_forward.3} parent=5 // pred_check_branch
      %264 = sbr.rel (%p261) target = $region12
    $region11: #{_forward.3} parent=5 // pred_region
      %s265 = ssub.s32 %s15, 1
      // Predicated region
      $region13: #{_forward.3} parent=11 // pred_check
        %p266 = pneg %p76
      $region14: #{_forward.3} parent=11 // pred_check_branch
        %268 = sbr.rel (%p266) target = $region16
      $region15: #{_forward.3} parent=11 // pred_region
        _
      $region16: #{_forward.3} parent=11 // pred_fallthru
        _
      // Predicated region
      $region17: #{_forward.3} parent=11 // pred_check
        %p269 = pneg %p97
      $region18: #{_forward.3} parent=11 // pred_check_branch
        %271 = sbr.rel (%p269) target = $region20
      $region19: #{_forward.3} parent=11 // pred_region
        _
      $region20: #{_forward.3} parent=11 // pred_fallthru
        _
      // Predicated region
      $region21: #{_forward.3} parent=11 // pred_check
        %p272 = pneg %p118
      $region22: #{_forward.3} parent=11 // pred_check_branch
        %274 = sbr.rel (%p272) target = $region24
      $region23: #{_forward.3} parent=11 // pred_region
        _
      $region24: #{_forward.3} parent=11 // pred_fallthru
        _
      // Predicated region
      $region25: #{_forward.3} parent=11 // pred_check
        %p275 = pneg %p139
      $region26: #{_forward.3} parent=11 // pred_check_branch
        %277 = sbr.rel (%p275) target = $region28
      $region27: #{_forward.3} parent=11 // pred_region
        _
      $region28: #{_forward.3} parent=11 // pred_fallthru
        _
      // Predicated region
      $region29: #{_forward.3} parent=11 // pred_check
        %p278 = pneg %p160
      $region30: #{_forward.3} parent=11 // pred_check_branch
        %280 = sbr.rel (%p278) target = $region32
      $region31: #{_forward.3} parent=11 // pred_region
        _
      $region32: #{_forward.3} parent=11 // pred_fallthru
        _
      // Predicated region
      $region33: #{_forward.3} parent=11 // pred_check
        %p281 = pneg %p181
      $region34: #{_forward.3} parent=11 // pred_check_branch
        %283 = sbr.rel (%p281) target = $region36
      $region35: #{_forward.3} parent=11 // pred_region
        _
      $region36: #{_forward.3} parent=11 // pred_fallthru
        _
      // Predicated region
      $region37: #{_forward.3} parent=11 // pred_check
        %p284 = pneg %p202
      $region38: #{_forward.3} parent=11 // pred_check_branch
        %286 = sbr.rel (%p284) target = $region40
      $region39: #{_forward.3} parent=11 // pred_region
        _
      $region40: #{_forward.3} parent=11 // pred_fallthru
        _
      // Predicated region
      $region41: #{_forward.3} parent=11 // pred_check
        %p287 = pneg %p223
      $region42: #{_forward.3} parent=11 // pred_check_branch
        %289 = sbr.rel (%p287) target = $region44
      $region43: #{_forward.3} parent=11 // pred_region
        _
      $region44: #{_forward.3} parent=11 // pred_fallthru
        _
    $region12: #{_forward.3} parent=5 // pred_fallthru
      _
    %p290 = scmp.lt.s32.totalorder %s15, 2
    // Predicated region
    $region45: #{_forward.3} parent=5 // pred_check
      %p291 = pneg %p290
    $region46: #{_forward.3} parent=5 // pred_check_branch
      %293 = sbr.rel (%p291) target = $region48
    $region47: #{_forward.3} parent=5 // pred_region
      // Predicated region
      $region49: #{_forward.3} parent=47 // pred_check
        %p294 = pneg %p49
      $region50: #{_forward.3} parent=47 // pred_check_branch
        %296 = sbr.rel (%p294) target = $region52
      $region51: #{_forward.3} parent=47 // pred_region
        %s297 = smul.u32 2, %s23
        %p298 = scmp.lt.s32.totalorder %s22, 1
        %s299 = scalar_select %p298, %s22, 1
        %p300 = scmp.lt.s32.totalorder %s297, 1
        %s301 = scalar_select %p300, %s297, 1
        %s302 = smul.addr %s299, 2
        %s303 = sadd.s32 %s301, %s302
        %s304 = smul.addr %s303, 2
        %s305 = scalar_lea.vmem %s0, %s304
        %s306 = smul.u32 2, %s23
      $region52: #{_forward.3} parent=47 // pred_fallthru
        _
    $region48: #{_forward.3} parent=5 // pred_fallthru
      _
    %p307 = scmp.le.s32.totalorder 1, %s15
    %p308 = scmp.lt.s32.totalorder %s15, 3
    %p309 = pnand %p307, %p308
    %p310 = pneg %p309
    // Predicated region
    $region53: #{_forward.3} parent=5 // pred_check
      _
    $region54: #{_forward.3} parent=5 // pred_check_branch
      %312 = sbr.rel (%p309) target = $region56
    $region55: #{_forward.3} parent=5 // pred_region
      %s313 = ssub.s32 %s15, 1
      %s314 = smul.u32 2, %s25
      %p315 = scmp.lt.s32.totalorder %s24, 1
      %s316 = scalar_select %p315, %s24, 1
      %p317 = scmp.lt.s32.totalorder %s314, 1
      %s318 = scalar_select %p317, %s314, 1
      %s319 = smul.addr %s316, 2
      %s320 = sadd.s32 %s318, %s319
      %s321 = smul.addr %s320, 2
      %s322 = scalar_lea.vmem %s0, %s321
      %p323 = pneg %p55
      %p324 = pneg %p52
      %p325 = pneg %p76
      %p326 = pneg %p73
      %p327 = pneg %p97
      %p328 = pneg %p94
      %p329 = pneg %p118
      %p330 = pneg %p115
      %p331 = pneg %p139
      %p332 = pneg %p136
      %p333 = pneg %p160
      %p334 = pneg %p157
      %p335 = pneg %p181
      %p336 = pneg %p178
      %p337 = pneg %p202
      %p338 = pneg %p199
      %p339 = pneg %p223
      %p340 = pneg %p220
      %p341 = pneg %p251
      %p342 = pneg %p248
      %s343 = smul.u32 2, %s25
      %p344 = scmp.lt.s32.totalorder %s24, 1
      %s345 = scalar_select %p344, %s24, 1
      %p346 = scmp.lt.s32.totalorder %s343, 1
      %s347 = scalar_select %p346, %s343, 1
      %s348 = smul.addr %s345, 2
      %s349 = sadd.s32 %s347, %s348
      %s350 = scalar_lea.vmem %s9, %s349
      %s351 = smul.u32 2, %s25
      %p352 = scmp.lt.s32.totalorder %s24, 1
      %s353 = scalar_select %p352, %s24, 1
      %p354 = scmp.lt.s32.totalorder %s351, 1
      %s355 = scalar_select %p354, %s351, 1
      %s356 = smul.addr %s353, 2
      %s357 = sadd.s32 %s355, %s356
      %s358 = smul.addr %s357, 2
      %s359 = scalar_lea.vmem %s0, %s358
      %s360 = smul.u32 2, %s25
      %s361 = smul.u32 2, %s25
      %p362 = scmp.lt.s32.totalorder %s24, 1
      %s363 = scalar_select %p362, %s24, 1
      %p364 = scmp.lt.s32.totalorder %s361, 1
      %s365 = scalar_select %p364, %s361, 1
      %s366 = smul.addr %s363, 2
      %s367 = sadd.s32 %s365, %s366
      %s368 = scalar_lea.vmem %s9, %s367
      %s369 = smul.u32 2, %s25
      %v372 = vld [vmem:[%s359] sm:$0xf]
      %v373 = vld [vmem:[%s1] sm:$0xf]
      %v374 = vld [vmem:[%s1 + $0x4] sm:$0xf]
      %v375 = vld [vmem:[%s1 + $0x8] sm:$0xf]
      %v376 = vld [vmem:[%s1 + $0xc] sm:$0xf]
      %v377 = vld [vmem:[%s1 + $0x10] sm:$0xf]
      %v378 = vld [vmem:[%s1 + $0x14] sm:$0xf]
      %v379 = vld [vmem:[%s1 + $0x18] sm:$0xf]
      %v380 = vld [vmem:[%s1 + $0x1c] sm:$0xf]
      %v381 = vld [vmem:[%s2] sm:$0xff]
      %v382 = vld [vmem:[%s2 + $0x8] sm:$0xff]
      %v383 = vld [vmem:[%s2 + $0x10] sm:$0xff]
      %v384 = vld [vmem:[%s2 + $0x18] sm:$0xff]
      %v385 = vld [vmem:[%s2 + $0x20] sm:$0xff]
      %v386 = vld [vmem:[%s2 + $0x28] sm:$0xff]
      %v387 = vld [vmem:[%s2 + $0x30] sm:$0xff]
      %v388 = vld [vmem:[%s2 + $0x38] sm:$0xff]
      %390 = vset.pattern.permute.xlu0 0
      %391 = vperm.xlu0 %390, %v381
      %v392 = vpop.permute.xlu0 %391
      %395 = vset.pattern.permute.xlu0 0
      %396 = vperm.xlu0 %395, %v382
      %v397 = vpop.permute.xlu0 %396
      %400 = vset.pattern.permute.xlu0 0
      %401 = vperm.xlu0 %400, %v383
      %v402 = vpop.permute.xlu0 %401
      %405 = vset.pattern.permute.xlu0 0
      %406 = vperm.xlu0 %405, %v384
      %v407 = vpop.permute.xlu0 %406
      %410 = vset.pattern.permute.xlu0 0
      %411 = vperm.xlu0 %410, %v385
      %v412 = vpop.permute.xlu0 %411
      %415 = vset.pattern.permute.xlu0 0
      %416 = vperm.xlu0 %415, %v386
      %v417 = vpop.permute.xlu0 %416
      %420 = vset.pattern.permute.xlu0 0
      %421 = vperm.xlu0 %420, %v387
      %v422 = vpop.permute.xlu0 %421
      %425 = vset.pattern.permute.xlu0 0
      %426 = vperm.xlu0 %425, %v388
      %v427 = vpop.permute.xlu0 %426
      %v437 = vunpack.c.l.b16 %v373
      %v438 = vunpack.c.l.b16 %v374
      %v439 = vunpack.c.l.b16 %v375
      %v440 = vunpack.c.l.b16 %v376
      %v441 = vunpack.c.l.b16 %v377
      %v442 = vunpack.c.l.b16 %v378
      %v443 = vunpack.c.l.b16 %v379
      %v444 = vunpack.c.l.b16 %v380
      %v445 = vpack.c.b16 %v438, %v437
      %v446 = vpack.c.b16 %v440, %v439
      %v447 = vpack.c.b16 %v442, %v441
      %v448 = vpack.c.b16 %v444, %v443
      %v451 = vunpack.c.l.s4 1983009808
      %v452 = vunpack.c.0.s8 %v451
      %v453 = vlaneseq
      %v454 = vshrl.u32 %v453, 7
      %v455 = vsub.s32 %v452, %v454
      %v456 = vrot.slane %v372, %v455
      %v457 = vcombine.high %v456, %v456
      %vm458 = vcmask 31744
      %v460 = vsel %vm458, %v445, 0
      %v463 = vsel %vm458, %v446, 0
      %v466 = vsel %vm458, %v447, 0
      %v469 = vsel %vm458, %v448, 0
      %vm471 = vcmask 1041408
      %v473 = vsel %vm471, %v456, 0
      %v476 = vsel %vm471, %v457, 0
      %478 = vmatprep.subr.bf16.mxu0 %v476
      %479 = vmatpush1.bf16.msra.mxu0 %v473
      %480 = vmatprep.subr.bf16.mxu0 0
      %481 = vmatpush1.bf16.msra.mxu0 0
      %482 = vmatprep.subr.bf16.mxu0 0
      %483 = vmatpush1.bf16.msra.mxu0 0
      %484 = vmatprep.subr.bf16.mxu0 0
      %485 = vmatpush1.bf16.msra.mxu0 0
      %486 = vmatprep.subr.bf16.mxu0 0
      %487 = vmatpush1.bf16.msra.mxu0 0
      %488 = vmatprep.subr.bf16.mxu0 0
      %489 = vmatpush1.bf16.msra.mxu0 0
      %490 = vmatprep.subr.bf16.mxu0 0
      %491 = vmatpush1.bf16.msra.mxu0 0
      %492 = vmatprep.subr.bf16.mxu0 0
      %493 = vmatpush1.bf16.msra.mxu0 0
      %494 = vmatprep.subr.bf16.mxu0 0
      %495 = vmatpush1.bf16.msra.mxu0 0
      %496 = vmatprep.subr.bf16.mxu0 0
      %497 = vmatpush1.bf16.msra.mxu0 0
      %498 = vmatprep.subr.bf16.mxu0 0
      %499 = vmatpush1.bf16.msra.mxu0 0
      %500 = vmatprep.subr.bf16.mxu0 0
      %501 = vmatpush1.bf16.msra.mxu0 0
      %502 = vmatprep.subr.bf16.mxu0 0
      %503 = vmatpush1.bf16.msra.mxu0 0
      %504 = vmatprep.subr.bf16.mxu0 0
      %505 = vmatpush1.bf16.msra.mxu0 0
      %506 = vmatprep.subr.bf16.mxu0 0
      %507 = vmatpush1.bf16.msra.mxu0 0
      %508 = vmatprep.subr.bf16.mxu0 0
      %509 = vmatpush1.bf16.msra.mxu0 0
      %510 = vmatprep.mubr.bf16.mxu0 0
      %511 = vmatmul.mubr.bf16.gmra.mrb[0].mxu0 %v460
      %v512 = vpop.f32.mrb[0].mxu0
      %v513 = vadd.f32 %v392, %v512
      %v514 = vpop.f32.mrb[0].mxu0
      %v515 = vadd.f32 %v392, %v514
      %v516 = vpop.f32.mrb[0].mxu0
      %v517 = vadd.f32 %v397, %v516
      %v518 = vpop.f32.mrb[0].mxu0
      %v519 = vadd.f32 %v397, %v518
      %520 = vmatprep.mubr.bf16.mxu0 0
      %521 = vmatmul.mubr.bf16.gmra.mrb[0].mxu0 %v463
      %v522 = vpop.f32.mrb[0].mxu0
      %v523 = vadd.f32 %v402, %v522
      %v524 = vpop.f32.mrb[0].mxu0
      %v525 = vadd.f32 %v402, %v524
      %v526 = vpop.f32.mrb[0].mxu0
      %v527 = vadd.f32 %v407, %v526
      %v528 = vpop.f32.mrb[0].mxu0
      %v529 = vadd.f32 %v407, %v528
      %530 = vmatprep.mubr.bf16.mxu0 0
      %531 = vmatmul.mubr.bf16.gmra.mrb[0].mxu0 %v466
      %v532 = vpop.f32.mrb[0].mxu0
      %v533 = vadd.f32 %v412, %v532
      %v534 = vpop.f32.mrb[0].mxu0
      %v535 = vadd.f32 %v412, %v534
      %v536 = vpop.f32.mrb[0].mxu0
      %v537 = vadd.f32 %v417, %v536
      %v538 = vpop.f32.mrb[0].mxu0
      %v539 = vadd.f32 %v417, %v538
      %540 = vmatprep.mubr.bf16.mxu0 0
      %541 = vmatmul.mubr.bf16.gmra.mrb[0].mxu0 %v469
      %v542 = vpop.f32.mrb[0].mxu0
      %v543 = vadd.f32 %v422, %v542
      %v544 = vpop.f32.mrb[0].mxu0
      %v545 = vadd.f32 %v422, %v544
      %v546 = vpop.f32.mrb[0].mxu0
      %v547 = vadd.f32 %v427, %v546
      %v548 = vpop.f32.mrb[0].mxu0
      %v549 = vadd.f32 %v427, %v548
      %550 = vdwg.mxu0
      %v551 = vmul.f32 %v513, 0.2
      %v552 = vmul.f32 %v515, 0.2
      %v553 = vmul.f32 %v517, 0.2
      %v554 = vmul.f32 %v519, 0.2
      %v555 = vmul.f32 %v523, 0.2
      %v556 = vmul.f32 %v525, 0.2
      %v557 = vmul.f32 %v527, 0.2
      %v558 = vmul.f32 %v529, 0.2
      %v559 = vmul.f32 %v533, 0.2
      %v560 = vmul.f32 %v535, 0.2
      %v561 = vmul.f32 %v537, 0.2
      %v562 = vmul.f32 %v539, 0.2
      %v563 = vmul.f32 %v543, 0.2
      %v564 = vmul.f32 %v545, 0.2
      %v565 = vmul.f32 %v547, 0.2
      %v566 = vmul.f32 %v549, 0.2
      %v567 = vmax.f32 %v513, %v551
      %v568 = vmax.f32 %v515, %v552
      %v569 = vmax.f32 %v517, %v553
      %v570 = vmax.f32 %v519, %v554
      %v571 = vmax.f32 %v523, %v555
      %v572 = vmax.f32 %v525, %v556
      %v573 = vmax.f32 %v527, %v557
      %v574 = vmax.f32 %v529, %v558
      %v575 = vmax.f32 %v533, %v559
      %v576 = vmax.f32 %v535, %v560
      %v577 = vmax.f32 %v537, %v561
      %v578 = vmax.f32 %v539, %v562
      %v579 = vmax.f32 %v543, %v563
      %v580 = vmax.f32 %v545, %v564
      %v581 = vmax.f32 %v547, %v565
      %v582 = vmax.f32 %v549, %v566
      %v583 = vld [vmem:[%s3] sm:$0xf]
      %v584 = vld [vmem:[%s3 + $0x4] sm:$0xf]
      %v585 = vld [vmem:[%s3 + $0x8] sm:$0xf]
      %v586 = vld [vmem:[%s3 + $0xc] sm:$0xf]
      %v587 = vld [vmem:[%s3 + $0x10] sm:$0xf]
      %v588 = vld [vmem:[%s3 + $0x14] sm:$0xf]
      %v589 = vld [vmem:[%s3 + $0x18] sm:$0xf]
      %v590 = vld [vmem:[%s3 + $0x1c] sm:$0xf]
      %v591 = vld [vmem:[%s3 + $0x20] sm:$0xf]
      %v592 = vld [vmem:[%s3 + $0x24] sm:$0xf]
      %v593 = vld [vmem:[%s3 + $0x28] sm:$0xf]
      %v594 = vld [vmem:[%s3 + $0x2c] sm:$0xf]
      %v595 = vld [vmem:[%s3 + $0x30] sm:$0xf]
      %v596 = vld [vmem:[%s3 + $0x34] sm:$0xf]
      %v597 = vld [vmem:[%s3 + $0x38] sm:$0xf]
      %v598 = vld [vmem:[%s3 + $0x3c] sm:$0xf]
      %v599 = vpack.c.bf16 %v569, %v567
      %v600 = vpack.c.bf16 %v570, %v568
      %v601 = vpack.c.bf16 %v573, %v571
      %v602 = vpack.c.bf16 %v574, %v572
      %v603 = vpack.c.bf16 %v577, %v575
      %v604 = vpack.c.bf16 %v578, %v576
      %v605 = vpack.c.bf16 %v581, %v579
      %v606 = vpack.c.bf16 %v582, %v580
      %v623 = vunpack.c.l.b16 %v583
      %v624 = vunpack.c.l.b16 %v584
      %v625 = vunpack.c.l.b16 %v585
      %v626 = vunpack.c.l.b16 %v586
      %v627 = vunpack.c.l.b16 %v587
      %v628 = vunpack.c.l.b16 %v588
      %v629 = vunpack.c.l.b16 %v589
      %v630 = vunpack.c.l.b16 %v590
      %v631 = vunpack.c.l.b16 %v591
      %v632 = vunpack.c.l.b16 %v592
      %v633 = vunpack.c.l.b16 %v593
      %v634 = vunpack.c.l.b16 %v594
      %v635 = vunpack.c.l.b16 %v595
      %v636 = vunpack.c.l.b16 %v596
      %v637 = vunpack.c.l.b16 %v597
      %v638 = vunpack.c.l.b16 %v598
      %v639 = vpack.c.b16 %v624, %v623
      %v640 = vpack.c.b16 %v626, %v625
      %v641 = vpack.c.b16 %v628, %v627
      %v642 = vpack.c.b16 %v630, %v629
      %v643 = vpack.c.b16 %v632, %v631
      %v644 = vpack.c.b16 %v634, %v633
      %v645 = vpack.c.b16 %v636, %v635
      %v646 = vpack.c.b16 %v638, %v637
      %vm647 = vcmask 523264
      %v649 = vsel %vm647, %v639, 0
      %v652 = vsel %vm647, %v640, 0
      %v655 = vsel %vm647, %v641, 0
      %v658 = vsel %vm647, %v642, 0
      %v661 = vsel %vm647, %v643, 0
      %v664 = vsel %vm647, %v644, 0
      %v667 = vsel %vm647, %v645, 0
      %v670 = vsel %vm647, %v646, 0
      %672 = vmatprep.subr.bf16.mxu0 %v600
      %673 = vmatpush1.bf16.msra.mxu0 %v599
      %674 = vmatprep.subr.bf16.mxu0 %v602
      %675 = vmatpush1.bf16.msra.mxu0 %v601
      %676 = vmatprep.subr.bf16.mxu0 %v604
      %677 = vmatpush1.bf16.msra.mxu0 %v603
      %678 = vmatprep.subr.bf16.mxu0 %v606
      %679 = vmatpush1.bf16.msra.mxu0 %v605
      %680 = vmatprep.subr.bf16.mxu0 0
      %681 = vmatpush1.bf16.msra.mxu0 0
      %682 = vmatprep.subr.bf16.mxu0 0
      %683 = vmatpush1.bf16.msra.mxu0 0
      %684 = vmatprep.subr.bf16.mxu0 0
      %685 = vmatpush1.bf16.msra.mxu0 0
      %686 = vmatprep.subr.bf16.mxu0 0
      %687 = vmatpush1.bf16.msra.mxu0 0
      %688 = vmatprep.subr.bf16.mxu0 0
      %689 = vmatpush1.bf16.msra.mxu0 0
      %690 = vmatprep.subr.bf16.mxu0 0
      %691 = vmatpush1.bf16.msra.mxu0 0
      %692 = vmatprep.subr.bf16.mxu0 0
      %693 = vmatpush1.bf16.msra.mxu0 0
      %694 = vmatprep.subr.bf16.mxu0 0
      %695 = vmatpush1.bf16.msra.mxu0 0
      %696 = vmatprep.subr.bf16.mxu0 0
      %697 = vmatpush1.bf16.msra.mxu0 0
      %698 = vmatprep.subr.bf16.mxu0 0
      %699 = vmatpush1.bf16.msra.mxu0 0
      %700 = vmatprep.subr.bf16.mxu0 0
      %701 = vmatpush1.bf16.msra.mxu0 0
      %702 = vmatprep.subr.bf16.mxu0 0
      %703 = vmatpush1.bf16.msra.mxu0 0
      %704 = vmatprep.mubr.bf16.mxu0 0
      %705 = vmatmul.mubr.bf16.gmra.mrb[0].mxu0 %v649
      %v706 = vpop.f32.mrb[0].mxu0
      %v707 = vadd.f32 0.0, %v706
      %v708 = vpop.f32.mrb[0].mxu0
      %v709 = vadd.f32 0.0, %v708
      %v710 = vpop.f32.mrb[0].mxu0
      %v711 = vadd.f32 0.0, %v710
      %v712 = vpop.f32.mrb[0].mxu0
      %v713 = vadd.f32 0.0, %v712
      %714 = vmatprep.mubr.bf16.mxu0 0
      %715 = vmatmul.mubr.bf16.gmra.mrb[0].mxu0 %v652
      %v716 = vpop.f32.mrb[0].mxu0
      %v717 = vadd.f32 0.0, %v716
      %v718 = vpop.f32.mrb[0].mxu0
      %v719 = vadd.f32 0.0, %v718
      %v720 = vpop.f32.mrb[0].mxu0
      %v721 = vadd.f32 0.0, %v720
      %v722 = vpop.f32.mrb[0].mxu0
      %v723 = vadd.f32 0.0, %v722
      %724 = vmatprep.mubr.bf16.mxu0 0
      %725 = vmatmul.mubr.bf16.gmra.mrb[0].mxu0 %v655
      %v726 = vpop.f32.mrb[0].mxu0
      %v727 = vadd.f32 0.0, %v726
      %v728 = vpop.f32.mrb[0].mxu0
      %v729 = vadd.f32 0.0, %v728
      %v730 = vpop.f32.mrb[0].mxu0
      %v731 = vadd.f32 0.0, %v730
      %v732 = vpop.f32.mrb[0].mxu0
      %v733 = vadd.f32 0.0, %v732
      %734 = vmatprep.mubr.bf16.mxu0 0
      %735 = vmatmul.mubr.bf16.gmra.mrb[0].mxu0 %v658
      %v736 = vpop.f32.mrb[0].mxu0
      %v737 = vadd.f32 0.0, %v736
      %v738 = vpop.f32.mrb[0].mxu0
      %v739 = vadd.f32 0.0, %v738
      %v740 = vpop.f32.mrb[0].mxu0
      %v741 = vadd.f32 0.0, %v740
      %v742 = vpop.f32.mrb[0].mxu0
      %v743 = vadd.f32 0.0, %v742
      %744 = vmatprep.mubr.bf16.mxu0 0
      %745 = vmatmul.mubr.bf16.gmra.mrb[0].mxu0 %v661
      %v746 = vpop.f32.mrb[0].mxu0
      %v747 = vadd.f32 0.0, %v746
      %v748 = vpop.f32.mrb[0].mxu0
      %v749 = vadd.f32 0.0, %v748
      %v750 = vpop.f32.mrb[0].mxu0
      %v751 = vadd.f32 0.0, %v750
      %v752 = vpop.f32.mrb[0].mxu0
      %v753 = vadd.f32 0.0, %v752
      %754 = vmatprep.mubr.bf16.mxu0 0
      %755 = vmatmul.mubr.bf16.gmra.mrb[0].mxu0 %v664
      %v756 = vpop.f32.mrb[0].mxu0
      %v757 = vadd.f32 0.0, %v756
      %v758 = vpop.f32.mrb[0].mxu0
      %v759 = vadd.f32 0.0, %v758
      %v760 = vpop.f32.mrb[0].mxu0
      %v761 = vadd.f32 0.0, %v760
      %v762 = vpop.f32.mrb[0].mxu0
      %v763 = vadd.f32 0.0, %v762
      %764 = vmatprep.mubr.bf16.mxu0 0
      %765 = vmatmul.mubr.bf16.gmra.mrb[0].mxu0 %v667
      %v766 = vpop.f32.mrb[0].mxu0
      %v767 = vadd.f32 0.0, %v766
      %v768 = vpop.f32.mrb[0].mxu0
      %v769 = vadd.f32 0.0, %v768
      %v770 = vpop.f32.mrb[0].mxu0
      %v771 = vadd.f32 0.0, %v770
      %v772 = vpop.f32.mrb[0].mxu0
      %v773 = vadd.f32 0.0, %v772
      %774 = vmatprep.mubr.bf16.mxu0 0
      %775 = vmatmul.mubr.bf16.gmra.mrb[0].mxu0 %v670
      %v776 = vpop.f32.mrb[0].mxu0
      %v777 = vadd.f32 0.0, %v776
      %v778 = vpop.f32.mrb[0].mxu0
      %v779 = vadd.f32 0.0, %v778
      %v780 = vpop.f32.mrb[0].mxu0
      %v781 = vadd.f32 0.0, %v780
      %v782 = vpop.f32.mrb[0].mxu0
      %v783 = vadd.f32 0.0, %v782
      %784 = vdwg.mxu0
      %v785 = vld [vmem:[%s4] sm:$0xff]
      %v786 = vld [vmem:[%s4 + $0x8] sm:$0xff]
      %v787 = vld [vmem:[%s4 + $0x10] sm:$0xff]
      %v788 = vld [vmem:[%s4 + $0x18] sm:$0xff]
      %v789 = vld [vmem:[%s4 + $0x20] sm:$0xff]
      %v790 = vld [vmem:[%s4 + $0x28] sm:$0xff]
      %v791 = vld [vmem:[%s4 + $0x30] sm:$0xff]
      %v792 = vld [vmem:[%s4 + $0x38] sm:$0xff]
      %v793 = vld [vmem:[%s4 + $0x40] sm:$0xff]
      %v794 = vld [vmem:[%s4 + $0x48] sm:$0xff]
      %v795 = vld [vmem:[%s4 + $0x50] sm:$0xff]
      %v796 = vld [vmem:[%s4 + $0x58] sm:$0xff]
      %v797 = vld [vmem:[%s4 + $0x60] sm:$0xff]
      %v798 = vld [vmem:[%s4 + $0x68] sm:$0xff]
      %v799 = vld [vmem:[%s4 + $0x70] sm:$0xff]
      %v800 = vld [vmem:[%s4 + $0x78] sm:$0xff]
      %v801 = vmul.f32 %v785, 0.001953125
      %v802 = vmul.f32 %v786, 0.001953125
      %v803 = vmul.f32 %v787, 0.001953125
      %v804 = vmul.f32 %v788, 0.001953125
      %v805 = vmul.f32 %v789, 0.001953125
      %v806 = vmul.f32 %v790, 0.001953125
      %v807 = vmul.f32 %v791, 0.001953125
      %v808 = vmul.f32 %v792, 0.001953125
      %v809 = vmul.f32 %v793, 0.001953125
      %v810 = vmul.f32 %v794, 0.001953125
      %v811 = vmul.f32 %v795, 0.001953125
      %v812 = vmul.f32 %v796, 0.001953125
      %v813 = vmul.f32 %v797, 0.001953125
      %v814 = vmul.f32 %v798, 0.001953125
      %v815 = vmul.f32 %v799, 0.001953125
      %v816 = vmul.f32 %v800, 0.001953125
      %v817 = vld [vmem:[%s5] sm:$0xff]
      %v818 = vld [vmem:[%s5 + $0x8] sm:$0xff]
      %v819 = vld [vmem:[%s5 + $0x10] sm:$0xff]
      %v820 = vld [vmem:[%s5 + $0x18] sm:$0xff]
      %v821 = vld [vmem:[%s5 + $0x20] sm:$0xff]
      %v822 = vld [vmem:[%s5 + $0x28] sm:$0xff]
      %v823 = vld [vmem:[%s5 + $0x30] sm:$0xff]
      %v824 = vld [vmem:[%s5 + $0x38] sm:$0xff]
      %v825 = vld [vmem:[%s5 + $0x40] sm:$0xff]
      %v826 = vld [vmem:[%s5 + $0x48] sm:$0xff]
      %v827 = vld [vmem:[%s5 + $0x50] sm:$0xff]
      %v828 = vld [vmem:[%s5 + $0x58] sm:$0xff]
      %v829 = vld [vmem:[%s5 + $0x60] sm:$0xff]
      %v830 = vld [vmem:[%s5 + $0x68] sm:$0xff]
      %v831 = vld [vmem:[%s5 + $0x70] sm:$0xff]
      %v832 = vld [vmem:[%s5 + $0x78] sm:$0xff]
      %v833 = vmul.f32 %v817, 0.001953125
      %v834 = vmul.f32 %v818, 0.001953125
      %v835 = vmul.f32 %v819, 0.001953125
      %v836 = vmul.f32 %v820, 0.001953125
      %v837 = vmul.f32 %v821, 0.001953125
      %v838 = vmul.f32 %v822, 0.001953125
      %v839 = vmul.f32 %v823, 0.001953125
      %v840 = vmul.f32 %v824, 0.001953125
      %v841 = vmul.f32 %v825, 0.001953125
      %v842 = vmul.f32 %v826, 0.001953125
      %v843 = vmul.f32 %v827, 0.001953125
      %v844 = vmul.f32 %v828, 0.001953125
      %v845 = vmul.f32 %v829, 0.001953125
      %v846 = vmul.f32 %v830, 0.001953125
      %v847 = vmul.f32 %v831, 0.001953125
      %v848 = vmul.f32 %v832, 0.001953125
      %v849 = vmul.f32 %v801, %v801
      %v850 = vmul.f32 %v802, %v802
      %v851 = vmul.f32 %v803, %v803
      %v852 = vmul.f32 %v804, %v804
      %v853 = vmul.f32 %v805, %v805
      %v854 = vmul.f32 %v806, %v806
      %v855 = vmul.f32 %v807, %v807
      %v856 = vmul.f32 %v808, %v808
      %v857 = vmul.f32 %v809, %v809
      %v858 = vmul.f32 %v810, %v810
      %v859 = vmul.f32 %v811, %v811
      %v860 = vmul.f32 %v812, %v812
      %v861 = vmul.f32 %v813, %v813
      %v862 = vmul.f32 %v814, %v814
      %v863 = vmul.f32 %v815, %v815
      %v864 = vmul.f32 %v816, %v816
      %v865 = vsub.f32 %v833, %v849
      %v866 = vsub.f32 %v834, %v850
      %v867 = vsub.f32 %v835, %v851
      %v868 = vsub.f32 %v836, %v852
      %v869 = vsub.f32 %v837, %v853
      %v870 = vsub.f32 %v838, %v854
      %v871 = vsub.f32 %v839, %v855
      %v872 = vsub.f32 %v840, %v856
      %v873 = vsub.f32 %v841, %v857
      %v874 = vsub.f32 %v842, %v858
      %v875 = vsub.f32 %v843, %v859
      %v876 = vsub.f32 %v844, %v860
      %v877 = vsub.f32 %v845, %v861
      %v878 = vsub.f32 %v846, %v862
      %v879 = vsub.f32 %v847, %v863
      %v880 = vsub.f32 %v848, %v864
      %v881 = vmax.f32 %v865, 0.0
      %v882 = vmax.f32 %v866, 0.0
      %v883 = vmax.f32 %v867, 0.0
      %v884 = vmax.f32 %v868, 0.0
      %v885 = vmax.f32 %v869, 0.0
      %v886 = vmax.f32 %v870, 0.0
      %v887 = vmax.f32 %v871, 0.0
      %v888 = vmax.f32 %v872, 0.0
      %v889 = vmax.f32 %v873, 0.0
      %v890 = vmax.f32 %v874, 0.0
      %v891 = vmax.f32 %v875, 0.0
      %v892 = vmax.f32 %v876, 0.0
      %v893 = vmax.f32 %v877, 0.0
      %v894 = vmax.f32 %v878, 0.0
      %v895 = vmax.f32 %v879, 0.0
      %v896 = vmax.f32 %v880, 0.0
      %v897 = vld [vmem:[%s6] sm:$0xff]
      %v898 = vld [vmem:[%s6 + $0x8] sm:$0xff]
      %v899 = vld [vmem:[%s6 + $0x10] sm:$0xff]
      %v900 = vld [vmem:[%s6 + $0x18] sm:$0xff]
      %v901 = vld [vmem:[%s6 + $0x20] sm:$0xff]
      %v902 = vld [vmem:[%s6 + $0x28] sm:$0xff]
      %v903 = vld [vmem:[%s6 + $0x30] sm:$0xff]
      %v904 = vld [vmem:[%s6 + $0x38] sm:$0xff]
      %v905 = vld [vmem:[%s6 + $0x40] sm:$0xff]
      %v906 = vld [vmem:[%s6 + $0x48] sm:$0xff]
      %v907 = vld [vmem:[%s6 + $0x50] sm:$0xff]
      %v908 = vld [vmem:[%s6 + $0x58] sm:$0xff]
      %v909 = vld [vmem:[%s6 + $0x60] sm:$0xff]
      %v910 = vld [vmem:[%s6 + $0x68] sm:$0xff]
      %v911 = vld [vmem:[%s6 + $0x70] sm:$0xff]
      %v912 = vld [vmem:[%s6 + $0x78] sm:$0xff]
      %v913 = vadd.f32 %v881, 1e-05
      %v914 = vadd.f32 %v882, 1e-05
      %v915 = vadd.f32 %v883, 1e-05
      %v916 = vadd.f32 %v884, 1e-05
      %v917 = vadd.f32 %v885, 1e-05
      %v918 = vadd.f32 %v886, 1e-05
      %v919 = vadd.f32 %v887, 1e-05
      %v920 = vadd.f32 %v888, 1e-05
      %v921 = vadd.f32 %v889, 1e-05
      %v922 = vadd.f32 %v890, 1e-05
      %v923 = vadd.f32 %v891, 1e-05
      %v924 = vadd.f32 %v892, 1e-05
      %v925 = vadd.f32 %v893, 1e-05
      %v926 = vadd.f32 %v894, 1e-05
      %v927 = vadd.f32 %v895, 1e-05
      %v928 = vadd.f32 %v896, 1e-05
      %v929 = vrsqrt.pop %v913
      %v930 = vrsqrt.pop %v914
      %v931 = vrsqrt.pop %v915
      %v932 = vrsqrt.pop %v916
      %v933 = vrsqrt.pop %v917
      %v934 = vrsqrt.pop %v918
      %v935 = vrsqrt.pop %v919
      %v936 = vrsqrt.pop %v920
      %v937 = vrsqrt.pop %v921
      %v938 = vrsqrt.pop %v922
      %v939 = vrsqrt.pop %v923
      %v940 = vrsqrt.pop %v924
      %v941 = vrsqrt.pop %v925
      %v942 = vrsqrt.pop %v926
      %v943 = vrsqrt.pop %v927
      %v944 = vrsqrt.pop %v928
      %v945 = vmul.f32 %v897, %v929
      %v946 = vmul.f32 %v898, %v930
      %v947 = vmul.f32 %v899, %v931
      %v948 = vmul.f32 %v900, %v932
      %v949 = vmul.f32 %v901, %v933
      %v950 = vmul.f32 %v902, %v934
      %v951 = vmul.f32 %v903, %v935
      %v952 = vmul.f32 %v904, %v936
      %v953 = vmul.f32 %v905, %v937
      %v954 = vmul.f32 %v906, %v938
      %v955 = vmul.f32 %v907, %v939
      %v956 = vmul.f32 %v908, %v940
      %v957 = vmul.f32 %v909, %v941
      %v958 = vmul.f32 %v910, %v942
      %v959 = vmul.f32 %v911, %v943
      %v960 = vmul.f32 %v912, %v944
      %v961 = vld [vmem:[%s7] sm:$0xff]
      %v962 = vld [vmem:[%s7 + $0x8] sm:$0xff]
      %v963 = vld [vmem:[%s7 + $0x10] sm:$0xff]
      %v964 = vld [vmem:[%s7 + $0x18] sm:$0xff]
      %v965 = vld [vmem:[%s7 + $0x20] sm:$0xff]
      %v966 = vld [vmem:[%s7 + $0x28] sm:$0xff]
      %v967 = vld [vmem:[%s7 + $0x30] sm:$0xff]
      %v968 = vld [vmem:[%s7 + $0x38] sm:$0xff]
      %v969 = vld [vmem:[%s7 + $0x40] sm:$0xff]
      %v970 = vld [vmem:[%s7 + $0x48] sm:$0xff]
      %v971 = vld [vmem:[%s7 + $0x50] sm:$0xff]
      %v972 = vld [vmem:[%s7 + $0x58] sm:$0xff]
      %v973 = vld [vmem:[%s7 + $0x60] sm:$0xff]
      %v974 = vld [vmem:[%s7 + $0x68] sm:$0xff]
      %v975 = vld [vmem:[%s7 + $0x70] sm:$0xff]
      %v976 = vld [vmem:[%s7 + $0x78] sm:$0xff]
      %v977 = vmul.f32 %v801, %v945
      %v978 = vmul.f32 %v802, %v946
      %v979 = vmul.f32 %v803, %v947
      %v980 = vmul.f32 %v804, %v948
      %v981 = vmul.f32 %v805, %v949
      %v982 = vmul.f32 %v806, %v950
      %v983 = vmul.f32 %v807, %v951
      %v984 = vmul.f32 %v808, %v952
      %v985 = vmul.f32 %v809, %v953
      %v986 = vmul.f32 %v810, %v954
      %v987 = vmul.f32 %v811, %v955
      %v988 = vmul.f32 %v812, %v956
      %v989 = vmul.f32 %v813, %v957
      %v990 = vmul.f32 %v814, %v958
      %v991 = vmul.f32 %v815, %v959
      %v992 = vmul.f32 %v816, %v960
      %v993 = vsub.f32 %v961, %v977
      %v994 = vsub.f32 %v962, %v978
      %v995 = vsub.f32 %v963, %v979
      %v996 = vsub.f32 %v964, %v980
      %v997 = vsub.f32 %v965, %v981
      %v998 = vsub.f32 %v966, %v982
      %v999 = vsub.f32 %v967, %v983
      %v1000 = vsub.f32 %v968, %v984
      %v1001 = vsub.f32 %v969, %v985
      %v1002 = vsub.f32 %v970, %v986
      %v1003 = vsub.f32 %v971, %v987
      %v1004 = vsub.f32 %v972, %v988
      %v1005 = vsub.f32 %v973, %v989
      %v1006 = vsub.f32 %v974, %v990
      %v1007 = vsub.f32 %v975, %v991
      %v1008 = vsub.f32 %v976, %v992
      %v1009 = vpack.c.bf16 %v711, %v707
      %v1010 = vpack.c.bf16 %v713, %v709
      %v1011 = vpack.c.bf16 %v721, %v717
      %v1012 = vpack.c.bf16 %v723, %v719
      %v1013 = vpack.c.bf16 %v731, %v727
      %v1014 = vpack.c.bf16 %v733, %v729
      %v1015 = vpack.c.bf16 %v741, %v737
      %v1016 = vpack.c.bf16 %v743, %v739
      %v1017 = vpack.c.bf16 %v751, %v747
      %v1018 = vpack.c.bf16 %v753, %v749
      %v1019 = vpack.c.bf16 %v761, %v757
      %v1020 = vpack.c.bf16 %v763, %v759
      %v1021 = vpack.c.bf16 %v771, %v767
      %v1022 = vpack.c.bf16 %v773, %v769
      %v1023 = vpack.c.bf16 %v781, %v777
      %v1024 = vpack.c.bf16 %v783, %v779
      %v1025 = vpack.c.bf16 %v946, %v945
      %v1026 = vpack.c.bf16 %v948, %v947
      %v1027 = vpack.c.bf16 %v950, %v949
      %v1028 = vpack.c.bf16 %v952, %v951
      %v1029 = vpack.c.bf16 %v954, %v953
      %v1030 = vpack.c.bf16 %v956, %v955
      %v1031 = vpack.c.bf16 %v958, %v957
      %v1032 = vpack.c.bf16 %v960, %v959
      %1034 = vset.pattern.permute.xlu0 0
      %1035 = vperm.xlu0 %1034, %v1025
      %v1036 = vpop.permute.xlu0 %1035
      %1039 = vset.pattern.permute.xlu0 0
      %1040 = vperm.xlu0 %1039, %v1026
      %v1041 = vpop.permute.xlu0 %1040
      %1044 = vset.pattern.permute.xlu0 0
      %1045 = vperm.xlu0 %1044, %v1027
      %v1046 = vpop.permute.xlu0 %1045
      %1049 = vset.pattern.permute.xlu0 0
      %1050 = vperm.xlu0 %1049, %v1028
      %v1051 = vpop.permute.xlu0 %1050
      %1054 = vset.pattern.permute.xlu0 0
      %1055 = vperm.xlu0 %1054, %v1029
      %v1056 = vpop.permute.xlu0 %1055
      %1059 = vset.pattern.permute.xlu0 0
      %1060 = vperm.xlu0 %1059, %v1030
      %v1061 = vpop.permute.xlu0 %1060
      %1064 = vset.pattern.permute.xlu0 0
      %1065 = vperm.xlu0 %1064, %v1031
      %v1066 = vpop.permute.xlu0 %1065
      %1069 = vset.pattern.permute.xlu0 0
      %1070 = vperm.xlu0 %1069, %v1032
      %v1071 = vpop.permute.xlu0 %1070
      %v1073 = vmul.bf16 %v1009, %v1036
      %v1074 = vmul.bf16 %v1010, %v1036
      %v1075 = vmul.bf16 %v1011, %v1041
      %v1076 = vmul.bf16 %v1012, %v1041
      %v1077 = vmul.bf16 %v1013, %v1046
      %v1078 = vmul.bf16 %v1014, %v1046
      %v1079 = vmul.bf16 %v1015, %v1051
      %v1080 = vmul.bf16 %v1016, %v1051
      %v1081 = vmul.bf16 %v1017, %v1056
      %v1082 = vmul.bf16 %v1018, %v1056
      %v1083 = vmul.bf16 %v1019, %v1061
      %v1084 = vmul.bf16 %v1020, %v1061
      %v1085 = vmul.bf16 %v1021, %v1066
      %v1086 = vmul.bf16 %v1022, %v1066
      %v1087 = vmul.bf16 %v1023, %v1071
      %v1088 = vmul.bf16 %v1024, %v1071
      %v1089 = vpack.c.bf16 %v994, %v993
      %v1090 = vpack.c.bf16 %v996, %v995
      %v1091 = vpack.c.bf16 %v998, %v997
      %v1092 = vpack.c.bf16 %v1000, %v999
      %v1093 = vpack.c.bf16 %v1002, %v1001
      %v1094 = vpack.c.bf16 %v1004, %v1003
      %v1095 = vpack.c.bf16 %v1006, %v1005
      %v1096 = vpack.c.bf16 %v1008, %v1007
      %1098 = vset.pattern.permute.xlu0 0
      %1099 = vperm.xlu0 %1098, %v1089
      %v1100 = vpop.permute.xlu0 %1099
      %1103 = vset.pattern.permute.xlu0 0
      %1104 = vperm.xlu0 %1103, %v1090
      %v1105 = vpop.permute.xlu0 %1104
      %1108 = vset.pattern.permute.xlu0 0
      %1109 = vperm.xlu0 %1108, %v1091
      %v1110 = vpop.permute.xlu0 %1109
      %1113 = vset.pattern.permute.xlu0 0
      %1114 = vperm.xlu0 %1113, %v1092
      %v1115 = vpop.permute.xlu0 %1114
      %1118 = vset.pattern.permute.xlu0 0
      %1119 = vperm.xlu0 %1118, %v1093
      %v1120 = vpop.permute.xlu0 %1119
      %1123 = vset.pattern.permute.xlu0 0
      %1124 = vperm.xlu0 %1123, %v1094
      %v1125 = vpop.permute.xlu0 %1124
      %1128 = vset.pattern.permute.xlu0 0
      %1129 = vperm.xlu0 %1128, %v1095
      %v1130 = vpop.permute.xlu0 %1129
      %1133 = vset.pattern.permute.xlu0 0
      %1134 = vperm.xlu0 %1133, %v1096
      %v1135 = vpop.permute.xlu0 %1134
      %v1137 = vadd.bf16 %v1073, %v1100
      %v1138 = vadd.bf16 %v1074, %v1100
      %v1139 = vadd.bf16 %v1075, %v1105
      %v1140 = vadd.bf16 %v1076, %v1105
      %v1141 = vadd.bf16 %v1077, %v1110
      %v1142 = vadd.bf16 %v1078, %v1110
      %v1143 = vadd.bf16 %v1079, %v1115
      %v1144 = vadd.bf16 %v1080, %v1115
      %v1145 = vadd.bf16 %v1081, %v1120
      %v1146 = vadd.bf16 %v1082, %v1120
      %v1147 = vadd.bf16 %v1083, %v1125
      %v1148 = vadd.bf16 %v1084, %v1125
      %v1149 = vadd.bf16 %v1085, %v1130
      %v1150 = vadd.bf16 %v1086, %v1130
      %v1151 = vadd.bf16 %v1087, %v1135
      %v1152 = vadd.bf16 %v1088, %v1135
      %v1153 = vmul.bf16 %v1137, 1045249613
      %v1154 = vmul.bf16 %v1138, 1045249613
      %v1155 = vmul.bf16 %v1139, 1045249613
      %v1156 = vmul.bf16 %v1140, 1045249613
      %v1157 = vmul.bf16 %v1141, 1045249613
      %v1158 = vmul.bf16 %v1142, 1045249613
      %v1159 = vmul.bf16 %v1143, 1045249613
      %v1160 = vmul.bf16 %v1144, 1045249613
      %v1161 = vmul.bf16 %v1145, 1045249613
      %v1162 = vmul.bf16 %v1146, 1045249613
      %v1163 = vmul.bf16 %v1147, 1045249613
      %v1164 = vmul.bf16 %v1148, 1045249613
      %v1165 = vmul.bf16 %v1149, 1045249613
      %v1166 = vmul.bf16 %v1150, 1045249613
      %v1167 = vmul.bf16 %v1151, 1045249613
      %v1168 = vmul.bf16 %v1152, 1045249613
      %v1169 = vmax.bf16 %v1137, %v1153
      %v1170 = vmax.bf16 %v1138, %v1154
      %v1171 = vmax.bf16 %v1139, %v1155
      %v1172 = vmax.bf16 %v1140, %v1156
      %v1173 = vmax.bf16 %v1141, %v1157
      %v1174 = vmax.bf16 %v1142, %v1158
      %v1175 = vmax.bf16 %v1143, %v1159
      %v1176 = vmax.bf16 %v1144, %v1160
      %v1177 = vmax.bf16 %v1145, %v1161
      %v1178 = vmax.bf16 %v1146, %v1162
      %v1179 = vmax.bf16 %v1147, %v1163
      %v1180 = vmax.bf16 %v1148, %v1164
      %v1181 = vmax.bf16 %v1149, %v1165
      %v1182 = vmax.bf16 %v1150, %v1166
      %v1183 = vmax.bf16 %v1151, %v1167
      %v1184 = vmax.bf16 %v1152, %v1168
      %v1185 = vld [vmem:[%s8] sm:$0x1]
      %1186 = vmatprep.subr.bf16.mxu0 %v1170
      %1187 = vmatpush1.bf16.msra.mxu0 %v1169
      %1188 = vmatprep.subr.bf16.mxu0 %v1172
      %1189 = vmatpush1.bf16.msra.mxu0 %v1171
      %1190 = vmatprep.subr.bf16.mxu0 %v1174
      %1191 = vmatpush1.bf16.msra.mxu0 %v1173
      %1192 = vmatprep.subr.bf16.mxu0 %v1176
      %1193 = vmatpush1.bf16.msra.mxu0 %v1175
      %1194 = vmatprep.subr.bf16.mxu0 %v1178
      %1195 = vmatpush1.bf16.msra.mxu0 %v1177
      %1196 = vmatprep.subr.bf16.mxu0 %v1180
      %1197 = vmatpush1.bf16.msra.mxu0 %v1179
      %1198 = vmatprep.subr.bf16.mxu0 %v1182
      %1199 = vmatpush1.bf16.msra.mxu0 %v1181
      %1200 = vmatprep.subr.bf16.mxu0 %v1184
      %1201 = vmatpush1.bf16.msra.mxu0 %v1183
      %1202 = vmatprep.subr.bf16.mxu0 0
      %1203 = vmatpush1.bf16.msra.mxu0 0
      %1204 = vmatprep.subr.bf16.mxu0 0
      %1205 = vmatpush1.bf16.msra.mxu0 0
      %1206 = vmatprep.subr.bf16.mxu0 0
      %1207 = vmatpush1.bf16.msra.mxu0 0
      %1208 = vmatprep.subr.bf16.mxu0 0
      %1209 = vmatpush1.bf16.msra.mxu0 0
      %1210 = vmatprep.subr.bf16.mxu0 0
      %1211 = vmatpush1.bf16.msra.mxu0 0
      %1212 = vmatprep.subr.bf16.mxu0 0
      %1213 = vmatpush1.bf16.msra.mxu0 0
      %1214 = vmatprep.subr.bf16.mxu0 0
      %1215 = vmatpush1.bf16.msra.mxu0 0
      %1216 = vmatprep.subr.bf16.mxu0 0
      %1217 = vmatpush1.bf16.msra.mxu0 0
      %1218 = vmatprep.mubr.bf16.mxu0 0
      %1219 = vmatmul.mubr.bf16.gmra.mrb[0].mxu0 %v1185
      %v1220 = vpop.f32.mrb[0].mxu0
      %v1221 = vadd.f32 0.0, %v1220
      %v1222 = vpop.f32.mrb[0].mxu0
      %v1223 = vadd.f32 0.0, %v1222
      %v1224 = vpop.f32.mrb[0].mxu0
      %v1225 = vpop.f32.mrb[0].mxu0
      %1226 = vdwg.mxu0
      %v1229 = vcombine.low %v1221, %v1223
      %v1231 = vunpack.c.l.s4 1966171168
      %v1232 = vunpack.c.0.s8 %v1231
      %v1233 = vlaneseq
      %v1234 = vshrl.u32 %v1233, 7
      %v1235 = vsub.s32 %v1232, %v1234
      %v1236 = vrot.slane %v1229, %v1235
      %v1238 = vunpack.c.l.s4 1966171168
      %v1239 = vunpack.c.0.s8 %v1238
      %v1240 = vlaneseq
      %v1241 = vshrl.u32 %v1240, 7
      %v1242 = vsub.s32 %v1239, %v1241
      %v1243 = vrot.slane %v1236, %v1242
      %v1245 = vlaneseq
      %vm1246 = vcmp.ge.s32.totalorder %v1245, 0
      %vm1247 = vcmp.lt.s32.totalorder %v1245, 256
      %vm1248 = vmand %vm1246, %vm1247
      %1249 = vst.msk [vmem:[%s368] sm:$0x3] %vm1248, %v1243
      %s1250 = smul.u32 2, %s25
      %p1251 = scmp.lt.s32.totalorder %s24, 1
      %s1252 = scalar_select %p1251, %s24, 1
      %p1253 = scmp.lt.s32.totalorder %s1250, 1
      %s1254 = scalar_select %p1253, %s1250, 1
      %s1255 = smul.addr %s1252, 2
      %s1256 = sadd.s32 %s1254, %s1255
      %s1257 = scalar_lea.vmem %s9, %s1256
      // Predicated region
      $region57: #{_forward.3} parent=55 // pred_check
        %p1258 = pneg %p248
      $region58: #{_forward.3} parent=55 // pred_check_branch
        %1260 = sbr.rel (%p1258) target = $region60
      $region59: #{_forward.3} parent=55 // pred_region
        %s1261 = smul.u32 2, %s25
      $region60: #{_forward.3} parent=55 // pred_fallthru
        _
    $region56: #{_forward.3} parent=5 // pred_fallthru
      _
    %p1262 = scmp.le.s32.totalorder 2, %s15
    // Predicated region
    $region61: #{_forward.3} parent=5 // pred_check
      %p1263 = pneg %p1262
    $region62: #{_forward.3} parent=5 // pred_check_branch
      %1265 = sbr.rel (%p1263) target = $region64
    $region63: #{_forward.3} parent=5 // pred_region
      %s1266 = ssub.s32 %s15, 2
      // Predicated region
      $region65: #{_forward.3} parent=63 // pred_check
        %p1267 = pneg %p254
      $region66: #{_forward.3} parent=63 // pred_check_branch
        %1269 = sbr.rel (%p1267) target = $region68
      $region67: #{_forward.3} parent=63 // pred_region
        %s1270 = smul.u32 2, %s27
        %p1271 = scmp.lt.s32.totalorder %s26, 1
        %s1272 = scalar_select %p1271, %s26, 1
        %p1273 = scmp.lt.s32.totalorder %s1270, 1
        %s1274 = scalar_select %p1273, %s1270, 1
        %s1275 = smul.addr %s1272, 2
        %s1276 = sadd.s32 %s1274, %s1275
        %s1277 = scalar_lea.vmem %s9, %s1276
      $region68: #{_forward.3} parent=63 // pred_fallthru
        _
    $region64: #{_forward.3} parent=5 // pred_fallthru
      _
  $region6: #{_forward.3} parent=0 // loop_footer
    %s19 = sadd.s32 1, %s15
  $region7: #{_forward.3} parent=0 // loop_footer_branch
    %14 = sbr.rel target = $region3
  $region8: #{_forward.3} parent=0 // loop_exit
    _

</llo_original>
